<compile_context>
chip_gen: v7x
topology: tpu7x:2x2x1
jax: 0.10.0
libtpu: 0.0.40
codegen_flags: <defaults>
</compile_context>

<pallas_src>
import functools

import jax
import jax.numpy as jnp
from jax.experimental import pallas as pl
from jax.experimental.pallas import tpu as pltpu


# ----------------------------- fused CBAM kernel ------------------------------

def _cbam_fused_kernel(x_ref, w1_ref, w2t_ref, wmask_ref, wsp_ref, b_ref,
                       out_ref, pad_ref, *, W, P):
    Nb, _, HW = x_ref.shape
    x = x_ref[...]                                        # (Nb, C, HW) f32

    # ---- channel attention: global avg / max pool over the flattened space.
    avg_c = jnp.mean(x, axis=2)                           # (Nb, C)
    max_c = jnp.max(x, axis=2)                            # (Nb, C)

    # Shared MLP (1x1 conv C->Cr, ReLU, 1x1 conv Cr->C) as VPU ops; an
    # M=2,K=32,N=2 MXU dot would waste a whole MXU tile + FIFO latency.
    w1 = w1_ref[...]                                      # (Cr, C)
    w2t = w2t_ref[...]                                    # (Cr, C) == w2.T
    h_a = jnp.maximum(jnp.sum(avg_c[:, None, :] * w1[None, :, :], axis=-1), 0.0)
    h_m = jnp.maximum(jnp.sum(max_c[:, None, :] * w1[None, :, :], axis=-1), 0.0)
    o_a = jnp.sum(h_a[:, :, None] * w2t[None, :, :], axis=1)          # (Nb, C)
    o_m = jnp.sum(h_m[:, :, None] * w2t[None, :, :], axis=1)          # (Nb, C)
    ca = jax.nn.sigmoid(o_a + o_m)                                     # (Nb, C)

    # ---- spatial-attention inputs: mean / max over channels of x*ca.
    # x*ca is a short-lived temp; it is NOT held across the conv phase.
    xca = x * ca[:, :, None]                              # (Nb, C, HW)
    avg_s = jnp.mean(xca, axis=1)                         # (Nb, HW)
    max_s = jnp.max(xca, axis=1)                          # (Nb, HW)

    # ---- stage the two flat maps into a zero-padded, lane-dense scratch.
    # Rows [0, Nb) = avg map, rows [Nb, 2Nb) = max map; P zero lanes on each
    # side provide the 7x7 halo, so row over/underflow needs no masking.
    pad_ref[...] = jnp.zeros_like(pad_ref)
    pad_ref[0:Nb, P:P + HW] = avg_s
    pad_ref[Nb:2 * Nb, P:P + HW] = max_s

    # ---- 7x7 conv (2 -> 1 channel, padding=3) on the flat maps.
    # out[h,w] = b + sum_{cin,dh,dw} tap * in[cin, h+dh-3, w+dw-3]
    # A (dh, dw) offset is a static lane shift of (dh-3)*W + (dw-3); column
    # wrap-around across rows is killed by a precomputed 0/1 mask per dw.
    acc = jnp.zeros((Nb, HW), jnp.float32)
    for dw in range(7):
        t_avg = jnp.zeros((Nb, HW), jnp.float32)          # independent accumulators
        t_max = jnp.zeros((Nb, HW), jnp.float32)          # break the FMA chain
        for dh in range(7):
            off = P + (dh - 3) * W + (dw - 3)
            t_avg = t_avg + wsp_ref[dh * 7 + dw] * pad_ref[0:Nb, off:off + HW]
            t_max = t_max + wsp_ref[49 + dh * 7 + dw] * pad_ref[Nb:2 * Nb, off:off + HW]
        acc = acc + wmask_ref[dw:dw + 1, :] * (t_avg + t_max)

    att = jax.nn.sigmoid(acc + b_ref[0])                  # (Nb, HW)

    # ---- final gating: out = x * (ca * att); one full lane-dense store.
    # TODO(synk): optionally emit bf16 here on v6e/v7x to halve write traffic.
    out_ref[...] = (x * (ca[:, :, None] * att[:, None, :])).astype(out_ref.dtype)


# ----------------------------- wrapper ----------------------------------------

def _pick_batch_block(n, bytes_per_image, target_bytes=2 << 20):
    """Largest divisor of n that (a) leaves >=2 grid steps when n >= 2 (both
    v7x TensorCores get work on the 'parallel' batch axis) and (b) keeps one
    in+out block pair, double-buffered, well inside the default scoped-VMEM
    budget on every generation (v7x has only 64 MiB physical VMEM)."""
    cap = max(1, n // 2)
    cap = min(cap, max(1, target_bytes // max(1, bytes_per_image)))
    best = 1
    for d in range(1, cap + 1):
        if n % d == 0:
            best = d
    return best


@jax.jit
def cbam_pallas(x, w1, w2, w_sp, b_sp):
    """CBAM forward. x: (N, C, H, W) f32 -> (N, C, H, W) f32."""
    N, C, H, W = x.shape
    HW = H * W
    Cr = w1.shape[0]

    # Lane-dense views: flatten spatial dims into the lane axis (free reshape).
    x_flat = x.reshape(N, C, HW)
    w2t = jnp.transpose(w2)                               # (Cr, C)
    w_taps = w_sp.reshape(2 * 7 * 7)                      # (cin, kh, kw) order

    # Column-validity masks for the flat 7x7 conv (one per kw offset).
    w_idx = jnp.arange(HW, dtype=jnp.int32) % W
    wmask = jnp.stack(
        [((w_idx + dw - 3 >= 0) & (w_idx + dw - 3 < W)).astype(jnp.float32)
         for dw in range(7)], axis=0)                     # (7, HW)

    Nb = _pick_batch_block(N, C * HW * x.dtype.itemsize)
    P = -(-(3 * W + 3) // 64) * 64                        # zero halo, 64-lane aligned

    kernel = functools.partial(_cbam_fused_kernel, W=W, P=P)
    out_flat = pl.pallas_call(
        kernel,
        out_shape=jax.ShapeDtypeStruct((N, C, HW), x.dtype),
        grid=(N // Nb,),
        in_specs=[
            pl.BlockSpec((Nb, C, HW), lambda n: (n, 0, 0)),
            pl.BlockSpec((Cr, C), lambda n: (0, 0)),
            pl.BlockSpec((Cr, C), lambda n: (0, 0)),
            pl.BlockSpec((7, HW), lambda n: (0, 0)),
            pl.BlockSpec(memory_space=pltpu.MemorySpace.SMEM),   # 98 conv taps
            pl.BlockSpec(memory_space=pltpu.MemorySpace.SMEM),   # conv bias
        ],
        out_specs=pl.BlockSpec((Nb, C, HW), lambda n: (n, 0, 0)),
        scratch_shapes=[pltpu.VMEM((2 * Nb, HW + 2 * P), jnp.float32)],
        compiler_params=pltpu.CompilerParams(
            dimension_semantics=("parallel",)),
    )(x_flat, w1, w2t, wmask, w_taps, b_sp)
    return out_flat.reshape(N, C, H, W)


# ----------------------------- pure-JAX reference ------------------------------

def cbam_ref(x, w1, w2, w_sp, b_sp):
    avg = jnp.mean(x, axis=(2, 3))                        # (N, C)
    mx = jnp.max(x, axis=(2, 3))                          # (N, C)

    def mlp(v):                                           # v: (N, C)
        h = jnp.maximum(v @ w1.T, 0.0)                    # (N, Cr)
        return h @ w2.T                                   # (N, C)

    ca = jax.nn.sigmoid(mlp(avg) + mlp(mx))[:, :, None, None]
    y = ca * x
    avg_s = jnp.mean(y, axis=1, keepdims=True)
    max_s = jnp.max(y, axis=1, keepdims=True)
    sp_in = jnp.concatenate([avg_s, max_s], axis=1)
    conv = jax.lax.conv_general_dilated(
        sp_in, w_sp, window_strides=(1, 1), padding=((3, 3), (3, 3)),
        dimension_numbers=("NCHW", "OIHW", "NCHW")) + b_sp[0]
    sa = jax.nn.sigmoid(conv)
    return sa * y


# ----------------------------- main --------------------------------------------

if __name__ == "__main__":
    N, C, H, W = 2, 32, 16, 16                            # channel=32 -> hidden 32//16=2
    ratio = 16
    Cr = C // ratio

    key = jax.random.PRNGKey(0)
    kx, k1, k2, k3, k4 = jax.random.split(key, 5)
    x = jax.random.normal(kx, (N, C, H, W), jnp.float32)
    # ChannelAttentionModule.shared_MLP weights (both 1x1 convs, no bias)
    w1 = jax.random.normal(k1, (Cr, C), jnp.float32) * 0.1
    w2 = jax.random.normal(k2, (C, Cr), jnp.float32) * 0.1
    # SpatialAttentionModule.conv2d: Conv2d(2, 1, 7, padding=3) with bias
    w_sp = jax.random.normal(k3, (1, 2, 7, 7), jnp.float32) * 0.1
    b_sp = jax.random.normal(k4, (1,), jnp.float32) * 0.1

    out = jax.block_until_ready(cbam_pallas(x, w1, w2, w_sp, b_sp))
    ref = jax.block_until_ready(cbam_ref(x, w1, w2, w_sp, b_sp))
    if not jnp.allclose(out, ref, rtol=1e-3, atol=1e-3):
        raise AssertionError("Pallas CBAM output mismatch vs. reference")

    print("KERNEL_OK")
</pallas_src>

<mosaic_0001>
module attributes {stable_mosaic.version = 11 : i64} {
  func.func @_cbam_fused_kernel(%arg0: i32, %arg1: memref<1x32x256xf32, #tpu.memory_space<vmem>>, %arg2: memref<2x32xf32, #tpu.memory_space<vmem>>, %arg3: memref<2x32xf32, #tpu.memory_space<vmem>>, %arg4: memref<7x256xf32, #tpu.memory_space<vmem>>, %arg5: memref<98xf32, #tpu.memory_space<smem>>, %arg6: memref<1xf32, #tpu.memory_space<smem>>, %arg7: memref<1x32x256xf32, #tpu.memory_space<vmem>>, %arg8: memref<2x384xf32, #tpu.memory_space<vmem>>) attributes {dimension_semantics = [#tpu.dimension_semantics<parallel>], iteration_bounds = array<i64: 2>, scalar_prefetch = 0 : i64, scratch_operands = 1 : i64, tpu.core_type = #tpu.core_type<tc>, window_params = [{transform_indices = @transform_0, window_bounds = array<i64: 1, 32, 256>}, {pipeline_mode = #tpu.pipeline_mode<synchronous>, transform_indices = @transform_1, window_bounds = array<i64: 2, 32>}, {pipeline_mode = #tpu.pipeline_mode<synchronous>, transform_indices = @transform_2, window_bounds = array<i64: 2, 32>}, {pipeline_mode = #tpu.pipeline_mode<synchronous>, transform_indices = @transform_3, window_bounds = array<i64: 7, 256>}, {transform_indices = @transform_4, window_bounds = array<i64: 98>}, {transform_indices = @transform_5, window_bounds = array<i64: 1>}, {transform_indices = @transform_6, window_bounds = array<i64: 1, 32, 256>}]} {
    %c0 = arith.constant 0 : index
    %c0_0 = arith.constant 0 : index
    %c0_1 = arith.constant 0 : index
    %0 = vector.load %arg1[%c0, %c0_0, %c0_1] : memref<1x32x256xf32, #tpu.memory_space<vmem>>, vector<1x32x256xf32>
    %cst = arith.constant dense<0.000000e+00> : vector<1x32xf32>
    %1 = vector.multi_reduction <add>, %0, %cst [2] : vector<1x32x256xf32> to vector<1x32xf32>
    %cst_2 = arith.constant 2.560000e+02 : f32
    %2 = vector.broadcast %cst_2 : f32 to vector<1x32xf32>
    %3 = arith.divf %1, %2 : vector<1x32xf32>
    %cst_3 = arith.constant dense<0xFF800000> : vector<1x32xf32>
    %4 = vector.multi_reduction <maximumf>, %0, %cst_3 [2] : vector<1x32x256xf32> to vector<1x32xf32>
    %c0_4 = arith.constant 0 : index
    %c0_5 = arith.constant 0 : index
    %5 = vector.load %arg2[%c0_4, %c0_5] : memref<2x32xf32, #tpu.memory_space<vmem>>, vector<2x32xf32>
    %c0_6 = arith.constant 0 : index
    %c0_7 = arith.constant 0 : index
    %6 = vector.load %arg3[%c0_6, %c0_7] : memref<2x32xf32, #tpu.memory_space<vmem>>, vector<2x32xf32>
    %7 = vector.shape_cast %3 : vector<1x32xf32> to vector<1x1x32xf32>
    %8 = vector.shape_cast %5 : vector<2x32xf32> to vector<1x2x32xf32>
    %9 = vector.broadcast %7 : vector<1x1x32xf32> to vector<1x2x32xf32>
    %10 = arith.mulf %9, %8 : vector<1x2x32xf32>
    %cst_8 = arith.constant dense<0.000000e+00> : vector<1x2xf32>
    %11 = vector.multi_reduction <add>, %10, %cst_8 [2] : vector<1x2x32xf32> to vector<1x2xf32>
    %cst_9 = arith.constant 0.000000e+00 : f32
    %12 = vector.broadcast %cst_9 : f32 to vector<1x2xf32>
    %13 = arith.maximumf %11, %12 : vector<1x2xf32>
    %14 = vector.shape_cast %4 : vector<1x32xf32> to vector<1x1x32xf32>
    %15 = vector.shape_cast %5 : vector<2x32xf32> to vector<1x2x32xf32>
    %16 = vector.broadcast %14 : vector<1x1x32xf32> to vector<1x2x32xf32>
    %17 = arith.mulf %16, %15 : vector<1x2x32xf32>
    %cst_10 = arith.constant dense<0.000000e+00> : vector<1x2xf32>
    %18 = vector.multi_reduction <add>, %17, %cst_10 [2] : vector<1x2x32xf32> to vector<1x2xf32>
    %cst_11 = arith.constant 0.000000e+00 : f32
    %19 = vector.broadcast %cst_11 : f32 to vector<1x2xf32>
    %20 = arith.maximumf %18, %19 : vector<1x2xf32>
    %21 = vector.shape_cast %13 : vector<1x2xf32> to vector<1x2x1xf32>
    %22 = vector.shape_cast %6 : vector<2x32xf32> to vector<1x2x32xf32>
    %23 = vector.broadcast %21 : vector<1x2x1xf32> to vector<1x2x32xf32>
    %24 = arith.mulf %23, %22 : vector<1x2x32xf32>
    %cst_12 = arith.constant dense<0.000000e+00> : vector<1x32xf32>
    %25 = vector.multi_reduction <add>, %24, %cst_12 [1] : vector<1x2x32xf32> to vector<1x32xf32>
    %26 = vector.shape_cast %20 : vector<1x2xf32> to vector<1x2x1xf32>
    %27 = vector.shape_cast %6 : vector<2x32xf32> to vector<1x2x32xf32>
    %28 = vector.broadcast %26 : vector<1x2x1xf32> to vector<1x2x32xf32>
    %29 = arith.mulf %28, %27 : vector<1x2x32xf32>
    %cst_13 = arith.constant dense<0.000000e+00> : vector<1x32xf32>
    %30 = vector.multi_reduction <add>, %29, %cst_13 [1] : vector<1x2x32xf32> to vector<1x32xf32>
    %31 = arith.addf %25, %30 : vector<1x32xf32>
    %32 = arith.negf %31 : vector<1x32xf32>
    %33 = math.exp %32 : vector<1x32xf32>
    %cst_14 = arith.constant 1.000000e+00 : f32
    %34 = vector.broadcast %cst_14 : f32 to vector<1x32xf32>
    %35 = arith.addf %34, %33 : vector<1x32xf32>
    %36 = arith.divf %34, %35 : vector<1x32xf32>
    %37 = vector.shape_cast %36 : vector<1x32xf32> to vector<1x32x1xf32>
    %38 = vector.broadcast %37 : vector<1x32x1xf32> to vector<1x32x256xf32>
    %39 = arith.mulf %0, %38 : vector<1x32x256xf32>
    %cst_15 = arith.constant dense<0.000000e+00> : vector<1x256xf32>
    %40 = vector.multi_reduction <add>, %39, %cst_15 [1] : vector<1x32x256xf32> to vector<1x256xf32>
    %cst_16 = arith.constant 3.200000e+01 : f32
    %41 = vector.broadcast %cst_16 : f32 to vector<1x256xf32>
    %42 = arith.divf %40, %41 : vector<1x256xf32>
    %cst_17 = arith.constant dense<0xFF800000> : vector<1x256xf32>
    %43 = vector.multi_reduction <maximumf>, %39, %cst_17 [1] : vector<1x32x256xf32> to vector<1x256xf32>
    %cst_18 = arith.constant 0.000000e+00 : f32
    %44 = vector.broadcast %cst_18 : f32 to vector<2x384xf32>
    %c0_19 = arith.constant 0 : index
    %c0_20 = arith.constant 0 : index
    %45 = vector.load %arg8[%c0_19, %c0_20] : memref<2x384xf32, #tpu.memory_space<vmem>>, vector<2x384xf32>
    tpu.vector_store %arg8[%c0_19, %c0_20], %44 {strides = array<i32>} : memref<2x384xf32, #tpu.memory_space<vmem>>, vector<2x384xf32>,
    %c0_21 = arith.constant 0 : index
    %c64 = arith.constant 64 : index
    %46 = vector.load %arg8[%c0_21, %c64] : memref<2x384xf32, #tpu.memory_space<vmem>>, vector<1x256xf32>
    tpu.vector_store %arg8[%c0_21, %c64], %42 {strides = array<i32>} : memref<2x384xf32, #tpu.memory_space<vmem>>, vector<1x256xf32>,
    %c1 = arith.constant 1 : index
    %c64_22 = arith.constant 64 : index
    %47 = vector.load %arg8[%c1, %c64_22] : memref<2x384xf32, #tpu.memory_space<vmem>>, vector<1x256xf32>
    tpu.vector_store %arg8[%c1, %c64_22], %43 {strides = array<i32>} : memref<2x384xf32, #tpu.memory_space<vmem>>, vector<1x256xf32>,
    %cst_23 = arith.constant 0.000000e+00 : f32
    %48 = vector.broadcast %cst_23 : f32 to vector<1x256xf32>
    %cst_24 = arith.constant 0.000000e+00 : f32
    %49 = vector.broadcast %cst_24 : f32 to vector<1x256xf32>
    %cst_25 = arith.constant 0.000000e+00 : f32
    %50 = vector.broadcast %cst_25 : f32 to vector<1x256xf32>
    %c0_26 = arith.constant 0 : index
    %51 = memref.load %arg5[%c0_26] : memref<98xf32, #tpu.memory_space<smem>>
    %c0_27 = arith.constant 0 : index
    %c13 = arith.constant 13 : index
    %52 = vector.load %arg8[%c0_27, %c13] : memref<2x384xf32, #tpu.memory_space<vmem>>, vector<1x256xf32>
    %53 = vector.broadcast %51 : f32 to vector<1x256xf32>
    %54 = arith.mulf %53, %52 : vector<1x256xf32>
    %55 = arith.addf %49, %54 : vector<1x256xf32>
    %c49 = arith.constant 49 : index
    %56 = memref.load %arg5[%c49] : memref<98xf32, #tpu.memory_space<smem>>
    %c1_28 = arith.constant 1 : index
    %c13_29 = arith.constant 13 : index
    %57 = vector.load %arg8[%c1_28, %c13_29] : memref<2x384xf32, #tpu.memory_space<vmem>>, vector<1x256xf32>
    %58 = vector.broadcast %56 : f32 to vector<1x256xf32>
    %59 = arith.mulf %58, %57 : vector<1x256xf32>
    %60 = arith.addf %50, %59 : vector<1x256xf32>
    %c7 = arith.constant 7 : index
    %61 = memref.load %arg5[%c7] : memref<98xf32, #tpu.memory_space<smem>>
    %c0_30 = arith.constant 0 : index
    %c29 = arith.constant 29 : index
    %62 = vector.load %arg8[%c0_30, %c29] : memref<2x384xf32, #tpu.memory_space<vmem>>, vector<1x256xf32>
    %63 = vector.broadcast %61 : f32 to vector<1x256xf32>
    %64 = arith.mulf %63, %62 : vector<1x256xf32>
    %65 = arith.addf %55, %64 : vector<1x256xf32>
    %c56 = arith.constant 56 : index
    %66 = memref.load %arg5[%c56] : memref<98xf32, #tpu.memory_space<smem>>
    %c1_31 = arith.constant 1 : index
    %c29_32 = arith.constant 29 : index
    %67 = vector.load %arg8[%c1_31, %c29_32] : memref<2x384xf32, #tpu.memory_space<vmem>>, vector<1x256xf32>
    %68 = vector.broadcast %66 : f32 to vector<1x256xf32>
    %69 = arith.mulf %68, %67 : vector<1x256xf32>
    %70 = arith.addf %60, %69 : vector<1x256xf32>
    %c14 = arith.constant 14 : index
    %71 = memref.load %arg5[%c14] : memref<98xf32, #tpu.memory_space<smem>>
    %c0_33 = arith.constant 0 : index
    %c45 = arith.constant 45 : index
    %72 = vector.load %arg8[%c0_33, %c45] : memref<2x384xf32, #tpu.memory_space<vmem>>, vector<1x256xf32>
    %73 = vector.broadcast %71 : f32 to vector<1x256xf32>
    %74 = arith.mulf %73, %72 : vector<1x256xf32>
    %75 = arith.addf %65, %74 : vector<1x256xf32>
    %c63 = arith.constant 63 : index
    %76 = memref.load %arg5[%c63] : memref<98xf32, #tpu.memory_space<smem>>
    %c1_34 = arith.constant 1 : index
    %c45_35 = arith.constant 45 : index
    %77 = vector.load %arg8[%c1_34, %c45_35] : memref<2x384xf32, #tpu.memory_space<vmem>>, vector<1x256xf32>
    %78 = vector.broadcast %76 : f32 to vector<1x256xf32>
    %79 = arith.mulf %78, %77 : vector<1x256xf32>
    %80 = arith.addf %70, %79 : vector<1x256xf32>
    %c21 = arith.constant 21 : index
    %81 = memref.load %arg5[%c21] : memref<98xf32, #tpu.memory_space<smem>>
    %c0_36 = arith.constant 0 : index
    %c61 = arith.constant 61 : index
    %82 = vector.load %arg8[%c0_36, %c61] : memref<2x384xf32, #tpu.memory_space<vmem>>, vector<1x256xf32>
    %83 = vector.broadcast %81 : f32 to vector<1x256xf32>
    %84 = arith.mulf %83, %82 : vector<1x256xf32>
    %85 = arith.addf %75, %84 : vector<1x256xf32>
    %c70 = arith.constant 70 : index
    %86 = memref.load %arg5[%c70] : memref<98xf32, #tpu.memory_space<smem>>
    %c1_37 = arith.constant 1 : index
    %c61_38 = arith.constant 61 : index
    %87 = vector.load %arg8[%c1_37, %c61_38] : memref<2x384xf32, #tpu.memory_space<vmem>>, vector<1x256xf32>
    %88 = vector.broadcast %86 : f32 to vector<1x256xf32>
    %89 = arith.mulf %88, %87 : vector<1x256xf32>
    %90 = arith.addf %80, %89 : vector<1x256xf32>
    %c28 = arith.constant 28 : index
    %91 = memref.load %arg5[%c28] : memref<98xf32, #tpu.memory_space<smem>>
    %c0_39 = arith.constant 0 : index
    %c77 = arith.constant 77 : index
    %92 = vector.load %arg8[%c0_39, %c77] : memref<2x384xf32, #tpu.memory_space<vmem>>, vector<1x256xf32>
    %93 = vector.broadcast %91 : f32 to vector<1x256xf32>
    %94 = arith.mulf %93, %92 : vector<1x256xf32>
    %95 = arith.addf %85, %94 : vector<1x256xf32>
    %c77_40 = arith.constant 77 : index
    %96 = memref.load %arg5[%c77_40] : memref<98xf32, #tpu.memory_space<smem>>
    %c1_41 = arith.constant 1 : index
    %c77_42 = arith.constant 77 : index
    %97 = vector.load %arg8[%c1_41, %c77_42] : memref<2x384xf32, #tpu.memory_space<vmem>>, vector<1x256xf32>
    %98 = vector.broadcast %96 : f32 to vector<1x256xf32>
    %99 = arith.mulf %98, %97 : vector<1x256xf32>
    %100 = arith.addf %90, %99 : vector<1x256xf32>
    %c35 = arith.constant 35 : index
    %101 = memref.load %arg5[%c35] : memref<98xf32, #tpu.memory_space<smem>>
    %c0_43 = arith.constant 0 : index
    %c93 = arith.constant 93 : index
    %102 = vector.load %arg8[%c0_43, %c93] : memref<2x384xf32, #tpu.memory_space<vmem>>, vector<1x256xf32>
    %103 = vector.broadcast %101 : f32 to vector<1x256xf32>
    %104 = arith.mulf %103, %102 : vector<1x256xf32>
    %105 = arith.addf %95, %104 : vector<1x256xf32>
    %c84 = arith.constant 84 : index
    %106 = memref.load %arg5[%c84] : memref<98xf32, #tpu.memory_space<smem>>
    %c1_44 = arith.constant 1 : index
    %c93_45 = arith.constant 93 : index
    %107 = vector.load %arg8[%c1_44, %c93_45] : memref<2x384xf32, #tpu.memory_space<vmem>>, vector<1x256xf32>
    %108 = vector.broadcast %106 : f32 to vector<1x256xf32>
    %109 = arith.mulf %108, %107 : vector<1x256xf32>
    %110 = arith.addf %100, %109 : vector<1x256xf32>
    %c42 = arith.constant 42 : index
    %111 = memref.load %arg5[%c42] : memref<98xf32, #tpu.memory_space<smem>>
    %c0_46 = arith.constant 0 : index
    %c109 = arith.constant 109 : index
    %112 = vector.load %arg8[%c0_46, %c109] : memref<2x384xf32, #tpu.memory_space<vmem>>, vector<1x256xf32>
    %113 = vector.broadcast %111 : f32 to vector<1x256xf32>
    %114 = arith.mulf %113, %112 : vector<1x256xf32>
    %115 = arith.addf %105, %114 : vector<1x256xf32>
    %c91 = arith.constant 91 : index
    %116 = memref.load %arg5[%c91] : memref<98xf32, #tpu.memory_space<smem>>
    %c1_47 = arith.constant 1 : index
    %c109_48 = arith.constant 109 : index
    %117 = vector.load %arg8[%c1_47, %c109_48] : memref<2x384xf32, #tpu.memory_space<vmem>>, vector<1x256xf32>
    %118 = vector.broadcast %116 : f32 to vector<1x256xf32>
    %119 = arith.mulf %118, %117 : vector<1x256xf32>
    %120 = arith.addf %110, %119 : vector<1x256xf32>
    %c0_49 = arith.constant 0 : index
    %c0_50 = arith.constant 0 : index
    %121 = vector.load %arg4[%c0_49, %c0_50] : memref<7x256xf32, #tpu.memory_space<vmem>>, vector<1x256xf32>
    %122 = arith.addf %115, %120 : vector<1x256xf32>
    %123 = arith.mulf %121, %122 : vector<1x256xf32>
    %124 = arith.addf %48, %123 : vector<1x256xf32>
    %cst_51 = arith.constant 0.000000e+00 : f32
    %125 = vector.broadcast %cst_51 : f32 to vector<1x256xf32>
    %cst_52 = arith.constant 0.000000e+00 : f32
    %126 = vector.broadcast %cst_52 : f32 to vector<1x256xf32>
    %c1_53 = arith.constant 1 : index
    %127 = memref.load %arg5[%c1_53] : memref<98xf32, #tpu.memory_space<smem>>
    %c0_54 = arith.constant 0 : index
    %c14_55 = arith.constant 14 : index
    %128 = vector.load %arg8[%c0_54, %c14_55] : memref<2x384xf32, #tpu.memory_space<vmem>>, vector<1x256xf32>
    %129 = vector.broadcast %127 : f32 to vector<1x256xf32>
    %130 = arith.mulf %129, %128 : vector<1x256xf32>
    %131 = arith.addf %125, %130 : vector<1x256xf32>
    %c50 = arith.constant 50 : index
    %132 = memref.load %arg5[%c50] : memref<98xf32, #tpu.memory_space<smem>>
    %c1_56 = arith.constant 1 : index
    %c14_57 = arith.constant 14 : index
    %133 = vector.load %arg8[%c1_56, %c14_57] : memref<2x384xf32, #tpu.memory_space<vmem>>, vector<1x256xf32>
    %134 = vector.broadcast %132 : f32 to vector<1x256xf32>
    %135 = arith.mulf %134, %133 : vector<1x256xf32>
    %136 = arith.addf %126, %135 : vector<1x256xf32>
    %c8 = arith.constant 8 : index
    %137 = memref.load %arg5[%c8] : memref<98xf32, #tpu.memory_space<smem>>
    %c0_58 = arith.constant 0 : index
    %c30 = arith.constant 30 : index
    %138 = vector.load %arg8[%c0_58, %c30] : memref<2x384xf32, #tpu.memory_space<vmem>>, vector<1x256xf32>
    %139 = vector.broadcast %137 : f32 to vector<1x256xf32>
    %140 = arith.mulf %139, %138 : vector<1x256xf32>
    %141 = arith.addf %131, %140 : vector<1x256xf32>
    %c57 = arith.constant 57 : index
    %142 = memref.load %arg5[%c57] : memref<98xf32, #tpu.memory_space<smem>>
    %c1_59 = arith.constant 1 : index
    %c30_60 = arith.constant 30 : index
    %143 = vector.load %arg8[%c1_59, %c30_60] : memref<2x384xf32, #tpu.memory_space<vmem>>, vector<1x256xf32>
    %144 = vector.broadcast %142 : f32 to vector<1x256xf32>
    %145 = arith.mulf %144, %143 : vector<1x256xf32>
    %146 = arith.addf %136, %145 : vector<1x256xf32>
    %c15 = arith.constant 15 : index
    %147 = memref.load %arg5[%c15] : memref<98xf32, #tpu.memory_space<smem>>
    %c0_61 = arith.constant 0 : index
    %c46 = arith.constant 46 : index
    %148 = vector.load %arg8[%c0_61, %c46] : memref<2x384xf32, #tpu.memory_space<vmem>>, vector<1x256xf32>
    %149 = vector.broadcast %147 : f32 to vector<1x256xf32>
    %150 = arith.mulf %149, %148 : vector<1x256xf32>
    %151 = arith.addf %141, %150 : vector<1x256xf32>
    %c64_62 = arith.constant 64 : index
    %152 = memref.load %arg5[%c64_62] : memref<98xf32, #tpu.memory_space<smem>>
    %c1_63 = arith.constant 1 : index
    %c46_64 = arith.constant 46 : index
    %153 = vector.load %arg8[%c1_63, %c46_64] : memref<2x384xf32, #tpu.memory_space<vmem>>, vector<1x256xf32>
    %154 = vector.broadcast %152 : f32 to vector<1x256xf32>
    %155 = arith.mulf %154, %153 : vector<1x256xf32>
    %156 = arith.addf %146, %155 : vector<1x256xf32>
    %c22 = arith.constant 22 : index
    %157 = memref.load %arg5[%c22] : memref<98xf32, #tpu.memory_space<smem>>
    %c0_65 = arith.constant 0 : index
    %c62 = arith.constant 62 : index
    %158 = vector.load %arg8[%c0_65, %c62] : memref<2x384xf32, #tpu.memory_space<vmem>>, vector<1x256xf32>
    %159 = vector.broadcast %157 : f32 to vector<1x256xf32>
    %160 = arith.mulf %159, %158 : vector<1x256xf32>
    %161 = arith.addf %151, %160 : vector<1x256xf32>
    %c71 = arith.constant 71 : index
    %162 = memref.load %arg5[%c71] : memref<98xf32, #tpu.memory_space<smem>>
    %c1_66 = arith.constant 1 : index
    %c62_67 = arith.constant 62 : index
    %163 = vector.load %arg8[%c1_66, %c62_67] : memref<2x384xf32, #tpu.memory_space<vmem>>, vector<1x256xf32>
    %164 = vector.broadcast %162 : f32 to vector<1x256xf32>
    %165 = arith.mulf %164, %163 : vector<1x256xf32>
    %166 = arith.addf %156, %165 : vector<1x256xf32>
    %c29_68 = arith.constant 29 : index
    %167 = memref.load %arg5[%c29_68] : memref<98xf32, #tpu.memory_space<smem>>
    %c0_69 = arith.constant 0 : index
    %c78 = arith.constant 78 : index
    %168 = vector.load %arg8[%c0_69, %c78] : memref<2x384xf32, #tpu.memory_space<vmem>>, vector<1x256xf32>
    %169 = vector.broadcast %167 : f32 to vector<1x256xf32>
    %170 = arith.mulf %169, %168 : vector<1x256xf32>
    %171 = arith.addf %161, %170 : vector<1x256xf32>
    %c78_70 = arith.constant 78 : index
    %172 = memref.load %arg5[%c78_70] : memref<98xf32, #tpu.memory_space<smem>>
    %c1_71 = arith.constant 1 : index
    %c78_72 = arith.constant 78 : index
    %173 = vector.load %arg8[%c1_71, %c78_72] : memref<2x384xf32, #tpu.memory_space<vmem>>, vector<1x256xf32>
    %174 = vector.broadcast %172 : f32 to vector<1x256xf32>
    %175 = arith.mulf %174, %173 : vector<1x256xf32>
    %176 = arith.addf %166, %175 : vector<1x256xf32>
    %c36 = arith.constant 36 : index
    %177 = memref.load %arg5[%c36] : memref<98xf32, #tpu.memory_space<smem>>
    %c0_73 = arith.constant 0 : index
    %c94 = arith.constant 94 : index
    %178 = vector.load %arg8[%c0_73, %c94] : memref<2x384xf32, #tpu.memory_space<vmem>>, vector<1x256xf32>
    %179 = vector.broadcast %177 : f32 to vector<1x256xf32>
    %180 = arith.mulf %179, %178 : vector<1x256xf32>
    %181 = arith.addf %171, %180 : vector<1x256xf32>
    %c85 = arith.constant 85 : index
    %182 = memref.load %arg5[%c85] : memref<98xf32, #tpu.memory_space<smem>>
    %c1_74 = arith.constant 1 : index
    %c94_75 = arith.constant 94 : index
    %183 = vector.load %arg8[%c1_74, %c94_75] : memref<2x384xf32, #tpu.memory_space<vmem>>, vector<1x256xf32>
    %184 = vector.broadcast %182 : f32 to vector<1x256xf32>
    %185 = arith.mulf %184, %183 : vector<1x256xf32>
    %186 = arith.addf %176, %185 : vector<1x256xf32>
    %c43 = arith.constant 43 : index
    %187 = memref.load %arg5[%c43] : memref<98xf32, #tpu.memory_space<smem>>
    %c0_76 = arith.constant 0 : index
    %c110 = arith.constant 110 : index
    %188 = vector.load %arg8[%c0_76, %c110] : memref<2x384xf32, #tpu.memory_space<vmem>>, vector<1x256xf32>
    %189 = vector.broadcast %187 : f32 to vector<1x256xf32>
    %190 = arith.mulf %189, %188 : vector<1x256xf32>
    %191 = arith.addf %181, %190 : vector<1x256xf32>
    %c92 = arith.constant 92 : index
    %192 = memref.load %arg5[%c92] : memref<98xf32, #tpu.memory_space<smem>>
    %c1_77 = arith.constant 1 : index
    %c110_78 = arith.constant 110 : index
    %193 = vector.load %arg8[%c1_77, %c110_78] : memref<2x384xf32, #tpu.memory_space<vmem>>, vector<1x256xf32>
    %194 = vector.broadcast %192 : f32 to vector<1x256xf32>
    %195 = arith.mulf %194, %193 : vector<1x256xf32>
    %196 = arith.addf %186, %195 : vector<1x256xf32>
    %c1_79 = arith.constant 1 : index
    %c0_80 = arith.constant 0 : index
    %197 = vector.load %arg4[%c1_79, %c0_80] : memref<7x256xf32, #tpu.memory_space<vmem>>, vector<1x256xf32>
    %198 = arith.addf %191, %196 : vector<1x256xf32>
    %199 = arith.mulf %197, %198 : vector<1x256xf32>
    %200 = arith.addf %124, %199 : vector<1x256xf32>
    %cst_81 = arith.constant 0.000000e+00 : f32
    %201 = vector.broadcast %cst_81 : f32 to vector<1x256xf32>
    %cst_82 = arith.constant 0.000000e+00 : f32
    %202 = vector.broadcast %cst_82 : f32 to vector<1x256xf32>
    %c2 = arith.constant 2 : index
    %203 = memref.load %arg5[%c2] : memref<98xf32, #tpu.memory_space<smem>>
    %c0_83 = arith.constant 0 : index
    %c15_84 = arith.constant 15 : index
    %204 = vector.load %arg8[%c0_83, %c15_84] : memref<2x384xf32, #tpu.memory_space<vmem>>, vector<1x256xf32>
    %205 = vector.broadcast %203 : f32 to vector<1x256xf32>
    %206 = arith.mulf %205, %204 : vector<1x256xf32>
    %207 = arith.addf %201, %206 : vector<1x256xf32>
    %c51 = arith.constant 51 : index
    %208 = memref.load %arg5[%c51] : memref<98xf32, #tpu.memory_space<smem>>
    %c1_85 = arith.constant 1 : index
    %c15_86 = arith.constant 15 : index
    %209 = vector.load %arg8[%c1_85, %c15_86] : memref<2x384xf32, #tpu.memory_space<vmem>>, vector<1x256xf32>
    %210 = vector.broadcast %208 : f32 to vector<1x256xf32>
    %211 = arith.mulf %210, %209 : vector<1x256xf32>
    %212 = arith.addf %202, %211 : vector<1x256xf32>
    %c9 = arith.constant 9 : index
    %213 = memref.load %arg5[%c9] : memref<98xf32, #tpu.memory_space<smem>>
    %c0_87 = arith.constant 0 : index
    %c31 = arith.constant 31 : index
    %214 = vector.load %arg8[%c0_87, %c31] : memref<2x384xf32, #tpu.memory_space<vmem>>, vector<1x256xf32>
    %215 = vector.broadcast %213 : f32 to vector<1x256xf32>
    %216 = arith.mulf %215, %214 : vector<1x256xf32>
    %217 = arith.addf %207, %216 : vector<1x256xf32>
    %c58 = arith.constant 58 : index
    %218 = memref.load %arg5[%c58] : memref<98xf32, #tpu.memory_space<smem>>
    %c1_88 = arith.constant 1 : index
    %c31_89 = arith.constant 31 : index
    %219 = vector.load %arg8[%c1_88, %c31_89] : memref<2x384xf32, #tpu.memory_space<vmem>>, vector<1x256xf32>
    %220 = vector.broadcast %218 : f32 to vector<1x256xf32>
    %221 = arith.mulf %220, %219 : vector<1x256xf32>
    %222 = arith.addf %212, %221 : vector<1x256xf32>
    %c16 = arith.constant 16 : index
    %223 = memref.load %arg5[%c16] : memref<98xf32, #tpu.memory_space<smem>>
    %c0_90 = arith.constant 0 : index
    %c47 = arith.constant 47 : index
    %224 = vector.load %arg8[%c0_90, %c47] : memref<2x384xf32, #tpu.memory_space<vmem>>, vector<1x256xf32>
    %225 = vector.broadcast %223 : f32 to vector<1x256xf32>
    %226 = arith.mulf %225, %224 : vector<1x256xf32>
    %227 = arith.addf %217, %226 : vector<1x256xf32>
    %c65 = arith.constant 65 : index
    %228 = memref.load %arg5[%c65] : memref<98xf32, #tpu.memory_space<smem>>
    %c1_91 = arith.constant 1 : index
    %c47_92 = arith.constant 47 : index
    %229 = vector.load %arg8[%c1_91, %c47_92] : memref<2x384xf32, #tpu.memory_space<vmem>>, vector<1x256xf32>
    %230 = vector.broadcast %228 : f32 to vector<1x256xf32>
    %231 = arith.mulf %230, %229 : vector<1x256xf32>
    %232 = arith.addf %222, %231 : vector<1x256xf32>
    %c23 = arith.constant 23 : index
    %233 = memref.load %arg5[%c23] : memref<98xf32, #tpu.memory_space<smem>>
    %c0_93 = arith.constant 0 : index
    %c63_94 = arith.constant 63 : index
    %234 = vector.load %arg8[%c0_93, %c63_94] : memref<2x384xf32, #tpu.memory_space<vmem>>, vector<1x256xf32>
    %235 = vector.broadcast %233 : f32 to vector<1x256xf32>
    %236 = arith.mulf %235, %234 : vector<1x256xf32>
    %237 = arith.addf %227, %236 : vector<1x256xf32>
    %c72 = arith.constant 72 : index
    %238 = memref.load %arg5[%c72] : memref<98xf32, #tpu.memory_space<smem>>
    %c1_95 = arith.constant 1 : index
    %c63_96 = arith.constant 63 : index
    %239 = vector.load %arg8[%c1_95, %c63_96] : memref<2x384xf32, #tpu.memory_space<vmem>>, vector<1x256xf32>
    %240 = vector.broadcast %238 : f32 to vector<1x256xf32>
    %241 = arith.mulf %240, %239 : vector<1x256xf32>
    %242 = arith.addf %232, %241 : vector<1x256xf32>
    %c30_97 = arith.constant 30 : index
    %243 = memref.load %arg5[%c30_97] : memref<98xf32, #tpu.memory_space<smem>>
    %c0_98 = arith.constant 0 : index
    %c79 = arith.constant 79 : index
    %244 = vector.load %arg8[%c0_98, %c79] : memref<2x384xf32, #tpu.memory_space<vmem>>, vector<1x256xf32>
    %245 = vector.broadcast %243 : f32 to vector<1x256xf32>
    %246 = arith.mulf %245, %244 : vector<1x256xf32>
    %247 = arith.addf %237, %246 : vector<1x256xf32>
    %c79_99 = arith.constant 79 : index
    %248 = memref.load %arg5[%c79_99] : memref<98xf32, #tpu.memory_space<smem>>
    %c1_100 = arith.constant 1 : index
    %c79_101 = arith.constant 79 : index
    %249 = vector.load %arg8[%c1_100, %c79_101] : memref<2x384xf32, #tpu.memory_space<vmem>>, vector<1x256xf32>
    %250 = vector.broadcast %248 : f32 to vector<1x256xf32>
    %251 = arith.mulf %250, %249 : vector<1x256xf32>
    %252 = arith.addf %242, %251 : vector<1x256xf32>
    %c37 = arith.constant 37 : index
    %253 = memref.load %arg5[%c37] : memref<98xf32, #tpu.memory_space<smem>>
    %c0_102 = arith.constant 0 : index
    %c95 = arith.constant 95 : index
    %254 = vector.load %arg8[%c0_102, %c95] : memref<2x384xf32, #tpu.memory_space<vmem>>, vector<1x256xf32>
    %255 = vector.broadcast %253 : f32 to vector<1x256xf32>
    %256 = arith.mulf %255, %254 : vector<1x256xf32>
    %257 = arith.addf %247, %256 : vector<1x256xf32>
    %c86 = arith.constant 86 : index
    %258 = memref.load %arg5[%c86] : memref<98xf32, #tpu.memory_space<smem>>
    %c1_103 = arith.constant 1 : index
    %c95_104 = arith.constant 95 : index
    %259 = vector.load %arg8[%c1_103, %c95_104] : memref<2x384xf32, #tpu.memory_space<vmem>>, vector<1x256xf32>
    %260 = vector.broadcast %258 : f32 to vector<1x256xf32>
    %261 = arith.mulf %260, %259 : vector<1x256xf32>
    %262 = arith.addf %252, %261 : vector<1x256xf32>
    %c44 = arith.constant 44 : index
    %263 = memref.load %arg5[%c44] : memref<98xf32, #tpu.memory_space<smem>>
    %c0_105 = arith.constant 0 : index
    %c111 = arith.constant 111 : index
    %264 = vector.load %arg8[%c0_105, %c111] : memref<2x384xf32, #tpu.memory_space<vmem>>, vector<1x256xf32>
    %265 = vector.broadcast %263 : f32 to vector<1x256xf32>
    %266 = arith.mulf %265, %264 : vector<1x256xf32>
    %267 = arith.addf %257, %266 : vector<1x256xf32>
    %c93_106 = arith.constant 93 : index
    %268 = memref.load %arg5[%c93_106] : memref<98xf32, #tpu.memory_space<smem>>
    %c1_107 = arith.constant 1 : index
    %c111_108 = arith.constant 111 : index
    %269 = vector.load %arg8[%c1_107, %c111_108] : memref<2x384xf32, #tpu.memory_space<vmem>>, vector<1x256xf32>
    %270 = vector.broadcast %268 : f32 to vector<1x256xf32>
    %271 = arith.mulf %270, %269 : vector<1x256xf32>
    %272 = arith.addf %262, %271 : vector<1x256xf32>
    %c2_109 = arith.constant 2 : index
    %c0_110 = arith.constant 0 : index
    %273 = vector.load %arg4[%c2_109, %c0_110] : memref<7x256xf32, #tpu.memory_space<vmem>>, vector<1x256xf32>
    %274 = arith.addf %267, %272 : vector<1x256xf32>
    %275 = arith.mulf %273, %274 : vector<1x256xf32>
    %276 = arith.addf %200, %275 : vector<1x256xf32>
    %cst_111 = arith.constant 0.000000e+00 : f32
    %277 = vector.broadcast %cst_111 : f32 to vector<1x256xf32>
    %cst_112 = arith.constant 0.000000e+00 : f32
    %278 = vector.broadcast %cst_112 : f32 to vector<1x256xf32>
    %c3 = arith.constant 3 : index
    %279 = memref.load %arg5[%c3] : memref<98xf32, #tpu.memory_space<smem>>
    %c0_113 = arith.constant 0 : index
    %c16_114 = arith.constant 16 : index
    %280 = vector.load %arg8[%c0_113, %c16_114] : memref<2x384xf32, #tpu.memory_space<vmem>>, vector<1x256xf32>
    %281 = vector.broadcast %279 : f32 to vector<1x256xf32>
    %282 = arith.mulf %281, %280 : vector<1x256xf32>
    %283 = arith.addf %277, %282 : vector<1x256xf32>
    %c52 = arith.constant 52 : index
    %284 = memref.load %arg5[%c52] : memref<98xf32, #tpu.memory_space<smem>>
    %c1_115 = arith.constant 1 : index
    %c16_116 = arith.constant 16 : index
    %285 = vector.load %arg8[%c1_115, %c16_116] : memref<2x384xf32, #tpu.memory_space<vmem>>, vector<1x256xf32>
    %286 = vector.broadcast %284 : f32 to vector<1x256xf32>
    %287 = arith.mulf %286, %285 : vector<1x256xf32>
    %288 = arith.addf %278, %287 : vector<1x256xf32>
    %c10 = arith.constant 10 : index
    %289 = memref.load %arg5[%c10] : memref<98xf32, #tpu.memory_space<smem>>
    %c0_117 = arith.constant 0 : index
    %c32 = arith.constant 32 : index
    %290 = vector.load %arg8[%c0_117, %c32] : memref<2x384xf32, #tpu.memory_space<vmem>>, vector<1x256xf32>
    %291 = vector.broadcast %289 : f32 to vector<1x256xf32>
    %292 = arith.mulf %291, %290 : vector<1x256xf32>
    %293 = arith.addf %283, %292 : vector<1x256xf32>
    %c59 = arith.constant 59 : index
    %294 = memref.load %arg5[%c59] : memref<98xf32, #tpu.memory_space<smem>>
    %c1_118 = arith.constant 1 : index
    %c32_119 = arith.constant 32 : index
    %295 = vector.load %arg8[%c1_118, %c32_119] : memref<2x384xf32, #tpu.memory_space<vmem>>, vector<1x256xf32>
    %296 = vector.broadcast %294 : f32 to vector<1x256xf32>
    %297 = arith.mulf %296, %295 : vector<1x256xf32>
    %298 = arith.addf %288, %297 : vector<1x256xf32>
    %c17 = arith.constant 17 : index
    %299 = memref.load %arg5[%c17] : memref<98xf32, #tpu.memory_space<smem>>
    %c0_120 = arith.constant 0 : index
    %c48 = arith.constant 48 : index
    %300 = vector.load %arg8[%c0_120, %c48] : memref<2x384xf32, #tpu.memory_space<vmem>>, vector<1x256xf32>
    %301 = vector.broadcast %299 : f32 to vector<1x256xf32>
    %302 = arith.mulf %301, %300 : vector<1x256xf32>
    %303 = arith.addf %293, %302 : vector<1x256xf32>
    %c66 = arith.constant 66 : index
    %304 = memref.load %arg5[%c66] : memref<98xf32, #tpu.memory_space<smem>>
    %c1_121 = arith.constant 1 : index
    %c48_122 = arith.constant 48 : index
    %305 = vector.load %arg8[%c1_121, %c48_122] : memref<2x384xf32, #tpu.memory_space<vmem>>, vector<1x256xf32>
    %306 = vector.broadcast %304 : f32 to vector<1x256xf32>
    %307 = arith.mulf %306, %305 : vector<1x256xf32>
    %308 = arith.addf %298, %307 : vector<1x256xf32>
    %c24 = arith.constant 24 : index
    %309 = memref.load %arg5[%c24] : memref<98xf32, #tpu.memory_space<smem>>
    %c0_123 = arith.constant 0 : index
    %c64_124 = arith.constant 64 : index
    %310 = vector.load %arg8[%c0_123, %c64_124] : memref<2x384xf32, #tpu.memory_space<vmem>>, vector<1x256xf32>
    %311 = vector.broadcast %309 : f32 to vector<1x256xf32>
    %312 = arith.mulf %311, %310 : vector<1x256xf32>
    %313 = arith.addf %303, %312 : vector<1x256xf32>
    %c73 = arith.constant 73 : index
    %314 = memref.load %arg5[%c73] : memref<98xf32, #tpu.memory_space<smem>>
    %c1_125 = arith.constant 1 : index
    %c64_126 = arith.constant 64 : index
    %315 = vector.load %arg8[%c1_125, %c64_126] : memref<2x384xf32, #tpu.memory_space<vmem>>, vector<1x256xf32>
    %316 = vector.broadcast %314 : f32 to vector<1x256xf32>
    %317 = arith.mulf %316, %315 : vector<1x256xf32>
    %318 = arith.addf %308, %317 : vector<1x256xf32>
    %c31_127 = arith.constant 31 : index
    %319 = memref.load %arg5[%c31_127] : memref<98xf32, #tpu.memory_space<smem>>
    %c0_128 = arith.constant 0 : index
    %c80 = arith.constant 80 : index
    %320 = vector.load %arg8[%c0_128, %c80] : memref<2x384xf32, #tpu.memory_space<vmem>>, vector<1x256xf32>
    %321 = vector.broadcast %319 : f32 to vector<1x256xf32>
    %322 = arith.mulf %321, %320 : vector<1x256xf32>
    %323 = arith.addf %313, %322 : vector<1x256xf32>
    %c80_129 = arith.constant 80 : index
    %324 = memref.load %arg5[%c80_129] : memref<98xf32, #tpu.memory_space<smem>>
    %c1_130 = arith.constant 1 : index
    %c80_131 = arith.constant 80 : index
    %325 = vector.load %arg8[%c1_130, %c80_131] : memref<2x384xf32, #tpu.memory_space<vmem>>, vector<1x256xf32>
    %326 = vector.broadcast %324 : f32 to vector<1x256xf32>
    %327 = arith.mulf %326, %325 : vector<1x256xf32>
    %328 = arith.addf %318, %327 : vector<1x256xf32>
    %c38 = arith.constant 38 : index
    %329 = memref.load %arg5[%c38] : memref<98xf32, #tpu.memory_space<smem>>
    %c0_132 = arith.constant 0 : index
    %c96 = arith.constant 96 : index
    %330 = vector.load %arg8[%c0_132, %c96] : memref<2x384xf32, #tpu.memory_space<vmem>>, vector<1x256xf32>
    %331 = vector.broadcast %329 : f32 to vector<1x256xf32>
    %332 = arith.mulf %331, %330 : vector<1x256xf32>
    %333 = arith.addf %323, %332 : vector<1x256xf32>
    %c87 = arith.constant 87 : index
    %334 = memref.load %arg5[%c87] : memref<98xf32, #tpu.memory_space<smem>>
    %c1_133 = arith.constant 1 : index
    %c96_134 = arith.constant 96 : index
    %335 = vector.load %arg8[%c1_133, %c96_134] : memref<2x384xf32, #tpu.memory_space<vmem>>, vector<1x256xf32>
    %336 = vector.broadcast %334 : f32 to vector<1x256xf32>
    %337 = arith.mulf %336, %335 : vector<1x256xf32>
    %338 = arith.addf %328, %337 : vector<1x256xf32>
    %c45_135 = arith.constant 45 : index
    %339 = memref.load %arg5[%c45_135] : memref<98xf32, #tpu.memory_space<smem>>
    %c0_136 = arith.constant 0 : index
    %c112 = arith.constant 112 : index
    %340 = vector.load %arg8[%c0_136, %c112] : memref<2x384xf32, #tpu.memory_space<vmem>>, vector<1x256xf32>
    %341 = vector.broadcast %339 : f32 to vector<1x256xf32>
    %342 = arith.mulf %341, %340 : vector<1x256xf32>
    %343 = arith.addf %333, %342 : vector<1x256xf32>
    %c94_137 = arith.constant 94 : index
    %344 = memref.load %arg5[%c94_137] : memref<98xf32, #tpu.memory_space<smem>>
    %c1_138 = arith.constant 1 : index
    %c112_139 = arith.constant 112 : index
    %345 = vector.load %arg8[%c1_138, %c112_139] : memref<2x384xf32, #tpu.memory_space<vmem>>, vector<1x256xf32>
    %346 = vector.broadcast %344 : f32 to vector<1x256xf32>
    %347 = arith.mulf %346, %345 : vector<1x256xf32>
    %348 = arith.addf %338, %347 : vector<1x256xf32>
    %c3_140 = arith.constant 3 : index
    %c0_141 = arith.constant 0 : index
    %349 = vector.load %arg4[%c3_140, %c0_141] : memref<7x256xf32, #tpu.memory_space<vmem>>, vector<1x256xf32>
    %350 = arith.addf %343, %348 : vector<1x256xf32>
    %351 = arith.mulf %349, %350 : vector<1x256xf32>
    %352 = arith.addf %276, %351 : vector<1x256xf32>
    %cst_142 = arith.constant 0.000000e+00 : f32
    %353 = vector.broadcast %cst_142 : f32 to vector<1x256xf32>
    %cst_143 = arith.constant 0.000000e+00 : f32
    %354 = vector.broadcast %cst_143 : f32 to vector<1x256xf32>
    %c4 = arith.constant 4 : index
    %355 = memref.load %arg5[%c4] : memref<98xf32, #tpu.memory_space<smem>>
    %c0_144 = arith.constant 0 : index
    %c17_145 = arith.constant 17 : index
    %356 = vector.load %arg8[%c0_144, %c17_145] : memref<2x384xf32, #tpu.memory_space<vmem>>, vector<1x256xf32>
    %357 = vector.broadcast %355 : f32 to vector<1x256xf32>
    %358 = arith.mulf %357, %356 : vector<1x256xf32>
    %359 = arith.addf %353, %358 : vector<1x256xf32>
    %c53 = arith.constant 53 : index
    %360 = memref.load %arg5[%c53] : memref<98xf32, #tpu.memory_space<smem>>
    %c1_146 = arith.constant 1 : index
    %c17_147 = arith.constant 17 : index
    %361 = vector.load %arg8[%c1_146, %c17_147] : memref<2x384xf32, #tpu.memory_space<vmem>>, vector<1x256xf32>
    %362 = vector.broadcast %360 : f32 to vector<1x256xf32>
    %363 = arith.mulf %362, %361 : vector<1x256xf32>
    %364 = arith.addf %354, %363 : vector<1x256xf32>
    %c11 = arith.constant 11 : index
    %365 = memref.load %arg5[%c11] : memref<98xf32, #tpu.memory_space<smem>>
    %c0_148 = arith.constant 0 : index
    %c33 = arith.constant 33 : index
    %366 = vector.load %arg8[%c0_148, %c33] : memref<2x384xf32, #tpu.memory_space<vmem>>, vector<1x256xf32>
    %367 = vector.broadcast %365 : f32 to vector<1x256xf32>
    %368 = arith.mulf %367, %366 : vector<1x256xf32>
    %369 = arith.addf %359, %368 : vector<1x256xf32>
    %c60 = arith.constant 60 : index
    %370 = memref.load %arg5[%c60] : memref<98xf32, #tpu.memory_space<smem>>
    %c1_149 = arith.constant 1 : index
    %c33_150 = arith.constant 33 : index
    %371 = vector.load %arg8[%c1_149, %c33_150] : memref<2x384xf32, #tpu.memory_space<vmem>>, vector<1x256xf32>
    %372 = vector.broadcast %370 : f32 to vector<1x256xf32>
    %373 = arith.mulf %372, %371 : vector<1x256xf32>
    %374 = arith.addf %364, %373 : vector<1x256xf32>
    %c18 = arith.constant 18 : index
    %375 = memref.load %arg5[%c18] : memref<98xf32, #tpu.memory_space<smem>>
    %c0_151 = arith.constant 0 : index
    %c49_152 = arith.constant 49 : index
    %376 = vector.load %arg8[%c0_151, %c49_152] : memref<2x384xf32, #tpu.memory_space<vmem>>, vector<1x256xf32>
    %377 = vector.broadcast %375 : f32 to vector<1x256xf32>
    %378 = arith.mulf %377, %376 : vector<1x256xf32>
    %379 = arith.addf %369, %378 : vector<1x256xf32>
    %c67 = arith.constant 67 : index
    %380 = memref.load %arg5[%c67] : memref<98xf32, #tpu.memory_space<smem>>
    %c1_153 = arith.constant 1 : index
    %c49_154 = arith.constant 49 : index
    %381 = vector.load %arg8[%c1_153, %c49_154] : memref<2x384xf32, #tpu.memory_space<vmem>>, vector<1x256xf32>
    %382 = vector.broadcast %380 : f32 to vector<1x256xf32>
    %383 = arith.mulf %382, %381 : vector<1x256xf32>
    %384 = arith.addf %374, %383 : vector<1x256xf32>
    %c25 = arith.constant 25 : index
    %385 = memref.load %arg5[%c25] : memref<98xf32, #tpu.memory_space<smem>>
    %c0_155 = arith.constant 0 : index
    %c65_156 = arith.constant 65 : index
    %386 = vector.load %arg8[%c0_155, %c65_156] : memref<2x384xf32, #tpu.memory_space<vmem>>, vector<1x256xf32>
    %387 = vector.broadcast %385 : f32 to vector<1x256xf32>
    %388 = arith.mulf %387, %386 : vector<1x256xf32>
    %389 = arith.addf %379, %388 : vector<1x256xf32>
    %c74 = arith.constant 74 : index
    %390 = memref.load %arg5[%c74] : memref<98xf32, #tpu.memory_space<smem>>
    %c1_157 = arith.constant 1 : index
    %c65_158 = arith.constant 65 : index
    %391 = vector.load %arg8[%c1_157, %c65_158] : memref<2x384xf32, #tpu.memory_space<vmem>>, vector<1x256xf32>
    %392 = vector.broadcast %390 : f32 to vector<1x256xf32>
    %393 = arith.mulf %392, %391 : vector<1x256xf32>
    %394 = arith.addf %384, %393 : vector<1x256xf32>
    %c32_159 = arith.constant 32 : index
    %395 = memref.load %arg5[%c32_159] : memref<98xf32, #tpu.memory_space<smem>>
    %c0_160 = arith.constant 0 : index
    %c81 = arith.constant 81 : index
    %396 = vector.load %arg8[%c0_160, %c81] : memref<2x384xf32, #tpu.memory_space<vmem>>, vector<1x256xf32>
    %397 = vector.broadcast %395 : f32 to vector<1x256xf32>
    %398 = arith.mulf %397, %396 : vector<1x256xf32>
    %399 = arith.addf %389, %398 : vector<1x256xf32>
    %c81_161 = arith.constant 81 : index
    %400 = memref.load %arg5[%c81_161] : memref<98xf32, #tpu.memory_space<smem>>
    %c1_162 = arith.constant 1 : index
    %c81_163 = arith.constant 81 : index
    %401 = vector.load %arg8[%c1_162, %c81_163] : memref<2x384xf32, #tpu.memory_space<vmem>>, vector<1x256xf32>
    %402 = vector.broadcast %400 : f32 to vector<1x256xf32>
    %403 = arith.mulf %402, %401 : vector<1x256xf32>
    %404 = arith.addf %394, %403 : vector<1x256xf32>
    %c39 = arith.constant 39 : index
    %405 = memref.load %arg5[%c39] : memref<98xf32, #tpu.memory_space<smem>>
    %c0_164 = arith.constant 0 : index
    %c97 = arith.constant 97 : index
    %406 = vector.load %arg8[%c0_164, %c97] : memref<2x384xf32, #tpu.memory_space<vmem>>, vector<1x256xf32>
    %407 = vector.broadcast %405 : f32 to vector<1x256xf32>
    %408 = arith.mulf %407, %406 : vector<1x256xf32>
    %409 = arith.addf %399, %408 : vector<1x256xf32>
    %c88 = arith.constant 88 : index
    %410 = memref.load %arg5[%c88] : memref<98xf32, #tpu.memory_space<smem>>
    %c1_165 = arith.constant 1 : index
    %c97_166 = arith.constant 97 : index
    %411 = vector.load %arg8[%c1_165, %c97_166] : memref<2x384xf32, #tpu.memory_space<vmem>>, vector<1x256xf32>
    %412 = vector.broadcast %410 : f32 to vector<1x256xf32>
    %413 = arith.mulf %412, %411 : vector<1x256xf32>
    %414 = arith.addf %404, %413 : vector<1x256xf32>
    %c46_167 = arith.constant 46 : index
    %415 = memref.load %arg5[%c46_167] : memref<98xf32, #tpu.memory_space<smem>>
    %c0_168 = arith.constant 0 : index
    %c113 = arith.constant 113 : index
    %416 = vector.load %arg8[%c0_168, %c113] : memref<2x384xf32, #tpu.memory_space<vmem>>, vector<1x256xf32>
    %417 = vector.broadcast %415 : f32 to vector<1x256xf32>
    %418 = arith.mulf %417, %416 : vector<1x256xf32>
    %419 = arith.addf %409, %418 : vector<1x256xf32>
    %c95_169 = arith.constant 95 : index
    %420 = memref.load %arg5[%c95_169] : memref<98xf32, #tpu.memory_space<smem>>
    %c1_170 = arith.constant 1 : index
    %c113_171 = arith.constant 113 : index
    %421 = vector.load %arg8[%c1_170, %c113_171] : memref<2x384xf32, #tpu.memory_space<vmem>>, vector<1x256xf32>
    %422 = vector.broadcast %420 : f32 to vector<1x256xf32>
    %423 = arith.mulf %422, %421 : vector<1x256xf32>
    %424 = arith.addf %414, %423 : vector<1x256xf32>
    %c4_172 = arith.constant 4 : index
    %c0_173 = arith.constant 0 : index
    %425 = vector.load %arg4[%c4_172, %c0_173] : memref<7x256xf32, #tpu.memory_space<vmem>>, vector<1x256xf32>
    %426 = arith.addf %419, %424 : vector<1x256xf32>
    %427 = arith.mulf %425, %426 : vector<1x256xf32>
    %428 = arith.addf %352, %427 : vector<1x256xf32>
    %cst_174 = arith.constant 0.000000e+00 : f32
    %429 = vector.broadcast %cst_174 : f32 to vector<1x256xf32>
    %cst_175 = arith.constant 0.000000e+00 : f32
    %430 = vector.broadcast %cst_175 : f32 to vector<1x256xf32>
    %c5 = arith.constant 5 : index
    %431 = memref.load %arg5[%c5] : memref<98xf32, #tpu.memory_space<smem>>
    %c0_176 = arith.constant 0 : index
    %c18_177 = arith.constant 18 : index
    %432 = vector.load %arg8[%c0_176, %c18_177] : memref<2x384xf32, #tpu.memory_space<vmem>>, vector<1x256xf32>
    %433 = vector.broadcast %431 : f32 to vector<1x256xf32>
    %434 = arith.mulf %433, %432 : vector<1x256xf32>
    %435 = arith.addf %429, %434 : vector<1x256xf32>
    %c54 = arith.constant 54 : index
    %436 = memref.load %arg5[%c54] : memref<98xf32, #tpu.memory_space<smem>>
    %c1_178 = arith.constant 1 : index
    %c18_179 = arith.constant 18 : index
    %437 = vector.load %arg8[%c1_178, %c18_179] : memref<2x384xf32, #tpu.memory_space<vmem>>, vector<1x256xf32>
    %438 = vector.broadcast %436 : f32 to vector<1x256xf32>
    %439 = arith.mulf %438, %437 : vector<1x256xf32>
    %440 = arith.addf %430, %439 : vector<1x256xf32>
    %c12 = arith.constant 12 : index
    %441 = memref.load %arg5[%c12] : memref<98xf32, #tpu.memory_space<smem>>
    %c0_180 = arith.constant 0 : index
    %c34 = arith.constant 34 : index
    %442 = vector.load %arg8[%c0_180, %c34] : memref<2x384xf32, #tpu.memory_space<vmem>>, vector<1x256xf32>
    %443 = vector.broadcast %441 : f32 to vector<1x256xf32>
    %444 = arith.mulf %443, %442 : vector<1x256xf32>
    %445 = arith.addf %435, %444 : vector<1x256xf32>
    %c61_181 = arith.constant 61 : index
    %446 = memref.load %arg5[%c61_181] : memref<98xf32, #tpu.memory_space<smem>>
    %c1_182 = arith.constant 1 : index
    %c34_183 = arith.constant 34 : index
    %447 = vector.load %arg8[%c1_182, %c34_183] : memref<2x384xf32, #tpu.memory_space<vmem>>, vector<1x256xf32>
    %448 = vector.broadcast %446 : f32 to vector<1x256xf32>
    %449 = arith.mulf %448, %447 : vector<1x256xf32>
    %450 = arith.addf %440, %449 : vector<1x256xf32>
    %c19 = arith.constant 19 : index
    %451 = memref.load %arg5[%c19] : memref<98xf32, #tpu.memory_space<smem>>
    %c0_184 = arith.constant 0 : index
    %c50_185 = arith.constant 50 : index
    %452 = vector.load %arg8[%c0_184, %c50_185] : memref<2x384xf32, #tpu.memory_space<vmem>>, vector<1x256xf32>
    %453 = vector.broadcast %451 : f32 to vector<1x256xf32>
    %454 = arith.mulf %453, %452 : vector<1x256xf32>
    %455 = arith.addf %445, %454 : vector<1x256xf32>
    %c68 = arith.constant 68 : index
    %456 = memref.load %arg5[%c68] : memref<98xf32, #tpu.memory_space<smem>>
    %c1_186 = arith.constant 1 : index
    %c50_187 = arith.constant 50 : index
    %457 = vector.load %arg8[%c1_186, %c50_187] : memref<2x384xf32, #tpu.memory_space<vmem>>, vector<1x256xf32>
    %458 = vector.broadcast %456 : f32 to vector<1x256xf32>
    %459 = arith.mulf %458, %457 : vector<1x256xf32>
    %460 = arith.addf %450, %459 : vector<1x256xf32>
    %c26 = arith.constant 26 : index
    %461 = memref.load %arg5[%c26] : memref<98xf32, #tpu.memory_space<smem>>
    %c0_188 = arith.constant 0 : index
    %c66_189 = arith.constant 66 : index
    %462 = vector.load %arg8[%c0_188, %c66_189] : memref<2x384xf32, #tpu.memory_space<vmem>>, vector<1x256xf32>
    %463 = vector.broadcast %461 : f32 to vector<1x256xf32>
    %464 = arith.mulf %463, %462 : vector<1x256xf32>
    %465 = arith.addf %455, %464 : vector<1x256xf32>
    %c75 = arith.constant 75 : index
    %466 = memref.load %arg5[%c75] : memref<98xf32, #tpu.memory_space<smem>>
    %c1_190 = arith.constant 1 : index
    %c66_191 = arith.constant 66 : index
    %467 = vector.load %arg8[%c1_190, %c66_191] : memref<2x384xf32, #tpu.memory_space<vmem>>, vector<1x256xf32>
    %468 = vector.broadcast %466 : f32 to vector<1x256xf32>
    %469 = arith.mulf %468, %467 : vector<1x256xf32>
    %470 = arith.addf %460, %469 : vector<1x256xf32>
    %c33_192 = arith.constant 33 : index
    %471 = memref.load %arg5[%c33_192] : memref<98xf32, #tpu.memory_space<smem>>
    %c0_193 = arith.constant 0 : index
    %c82 = arith.constant 82 : index
    %472 = vector.load %arg8[%c0_193, %c82] : memref<2x384xf32, #tpu.memory_space<vmem>>, vector<1x256xf32>
    %473 = vector.broadcast %471 : f32 to vector<1x256xf32>
    %474 = arith.mulf %473, %472 : vector<1x256xf32>
    %475 = arith.addf %465, %474 : vector<1x256xf32>
    %c82_194 = arith.constant 82 : index
    %476 = memref.load %arg5[%c82_194] : memref<98xf32, #tpu.memory_space<smem>>
    %c1_195 = arith.constant 1 : index
    %c82_196 = arith.constant 82 : index
    %477 = vector.load %arg8[%c1_195, %c82_196] : memref<2x384xf32, #tpu.memory_space<vmem>>, vector<1x256xf32>
    %478 = vector.broadcast %476 : f32 to vector<1x256xf32>
    %479 = arith.mulf %478, %477 : vector<1x256xf32>
    %480 = arith.addf %470, %479 : vector<1x256xf32>
    %c40 = arith.constant 40 : index
    %481 = memref.load %arg5[%c40] : memref<98xf32, #tpu.memory_space<smem>>
    %c0_197 = arith.constant 0 : index
    %c98 = arith.constant 98 : index
    %482 = vector.load %arg8[%c0_197, %c98] : memref<2x384xf32, #tpu.memory_space<vmem>>, vector<1x256xf32>
    %483 = vector.broadcast %481 : f32 to vector<1x256xf32>
    %484 = arith.mulf %483, %482 : vector<1x256xf32>
    %485 = arith.addf %475, %484 : vector<1x256xf32>
    %c89 = arith.constant 89 : index
    %486 = memref.load %arg5[%c89] : memref<98xf32, #tpu.memory_space<smem>>
    %c1_198 = arith.constant 1 : index
    %c98_199 = arith.constant 98 : index
    %487 = vector.load %arg8[%c1_198, %c98_199] : memref<2x384xf32, #tpu.memory_space<vmem>>, vector<1x256xf32>
    %488 = vector.broadcast %486 : f32 to vector<1x256xf32>
    %489 = arith.mulf %488, %487 : vector<1x256xf32>
    %490 = arith.addf %480, %489 : vector<1x256xf32>
    %c47_200 = arith.constant 47 : index
    %491 = memref.load %arg5[%c47_200] : memref<98xf32, #tpu.memory_space<smem>>
    %c0_201 = arith.constant 0 : index
    %c114 = arith.constant 114 : index
    %492 = vector.load %arg8[%c0_201, %c114] : memref<2x384xf32, #tpu.memory_space<vmem>>, vector<1x256xf32>
    %493 = vector.broadcast %491 : f32 to vector<1x256xf32>
    %494 = arith.mulf %493, %492 : vector<1x256xf32>
    %495 = arith.addf %485, %494 : vector<1x256xf32>
    %c96_202 = arith.constant 96 : index
    %496 = memref.load %arg5[%c96_202] : memref<98xf32, #tpu.memory_space<smem>>
    %c1_203 = arith.constant 1 : index
    %c114_204 = arith.constant 114 : index
    %497 = vector.load %arg8[%c1_203, %c114_204] : memref<2x384xf32, #tpu.memory_space<vmem>>, vector<1x256xf32>
    %498 = vector.broadcast %496 : f32 to vector<1x256xf32>
    %499 = arith.mulf %498, %497 : vector<1x256xf32>
    %500 = arith.addf %490, %499 : vector<1x256xf32>
    %c5_205 = arith.constant 5 : index
    %c0_206 = arith.constant 0 : index
    %501 = vector.load %arg4[%c5_205, %c0_206] : memref<7x256xf32, #tpu.memory_space<vmem>>, vector<1x256xf32>
    %502 = arith.addf %495, %500 : vector<1x256xf32>
    %503 = arith.mulf %501, %502 : vector<1x256xf32>
    %504 = arith.addf %428, %503 : vector<1x256xf32>
    %cst_207 = arith.constant 0.000000e+00 : f32
    %505 = vector.broadcast %cst_207 : f32 to vector<1x256xf32>
    %cst_208 = arith.constant 0.000000e+00 : f32
    %506 = vector.broadcast %cst_208 : f32 to vector<1x256xf32>
    %c6 = arith.constant 6 : index
    %507 = memref.load %arg5[%c6] : memref<98xf32, #tpu.memory_space<smem>>
    %c0_209 = arith.constant 0 : index
    %c19_210 = arith.constant 19 : index
    %508 = vector.load %arg8[%c0_209, %c19_210] : memref<2x384xf32, #tpu.memory_space<vmem>>, vector<1x256xf32>
    %509 = vector.broadcast %507 : f32 to vector<1x256xf32>
    %510 = arith.mulf %509, %508 : vector<1x256xf32>
    %511 = arith.addf %505, %510 : vector<1x256xf32>
    %c55 = arith.constant 55 : index
    %512 = memref.load %arg5[%c55] : memref<98xf32, #tpu.memory_space<smem>>
    %c1_211 = arith.constant 1 : index
    %c19_212 = arith.constant 19 : index
    %513 = vector.load %arg8[%c1_211, %c19_212] : memref<2x384xf32, #tpu.memory_space<vmem>>, vector<1x256xf32>
    %514 = vector.broadcast %512 : f32 to vector<1x256xf32>
    %515 = arith.mulf %514, %513 : vector<1x256xf32>
    %516 = arith.addf %506, %515 : vector<1x256xf32>
    %c13_213 = arith.constant 13 : index
    %517 = memref.load %arg5[%c13_213] : memref<98xf32, #tpu.memory_space<smem>>
    %c0_214 = arith.constant 0 : index
    %c35_215 = arith.constant 35 : index
    %518 = vector.load %arg8[%c0_214, %c35_215] : memref<2x384xf32, #tpu.memory_space<vmem>>, vector<1x256xf32>
    %519 = vector.broadcast %517 : f32 to vector<1x256xf32>
    %520 = arith.mulf %519, %518 : vector<1x256xf32>
    %521 = arith.addf %511, %520 : vector<1x256xf32>
    %c62_216 = arith.constant 62 : index
    %522 = memref.load %arg5[%c62_216] : memref<98xf32, #tpu.memory_space<smem>>
    %c1_217 = arith.constant 1 : index
    %c35_218 = arith.constant 35 : index
    %523 = vector.load %arg8[%c1_217, %c35_218] : memref<2x384xf32, #tpu.memory_space<vmem>>, vector<1x256xf32>
    %524 = vector.broadcast %522 : f32 to vector<1x256xf32>
    %525 = arith.mulf %524, %523 : vector<1x256xf32>
    %526 = arith.addf %516, %525 : vector<1x256xf32>
    %c20 = arith.constant 20 : index
    %527 = memref.load %arg5[%c20] : memref<98xf32, #tpu.memory_space<smem>>
    %c0_219 = arith.constant 0 : index
    %c51_220 = arith.constant 51 : index
    %528 = vector.load %arg8[%c0_219, %c51_220] : memref<2x384xf32, #tpu.memory_space<vmem>>, vector<1x256xf32>
    %529 = vector.broadcast %527 : f32 to vector<1x256xf32>
    %530 = arith.mulf %529, %528 : vector<1x256xf32>
    %531 = arith.addf %521, %530 : vector<1x256xf32>
    %c69 = arith.constant 69 : index
    %532 = memref.load %arg5[%c69] : memref<98xf32, #tpu.memory_space<smem>>
    %c1_221 = arith.constant 1 : index
    %c51_222 = arith.constant 51 : index
    %533 = vector.load %arg8[%c1_221, %c51_222] : memref<2x384xf32, #tpu.memory_space<vmem>>, vector<1x256xf32>
    %534 = vector.broadcast %532 : f32 to vector<1x256xf32>
    %535 = arith.mulf %534, %533 : vector<1x256xf32>
    %536 = arith.addf %526, %535 : vector<1x256xf32>
    %c27 = arith.constant 27 : index
    %537 = memref.load %arg5[%c27] : memref<98xf32, #tpu.memory_space<smem>>
    %c0_223 = arith.constant 0 : index
    %c67_224 = arith.constant 67 : index
    %538 = vector.load %arg8[%c0_223, %c67_224] : memref<2x384xf32, #tpu.memory_space<vmem>>, vector<1x256xf32>
    %539 = vector.broadcast %537 : f32 to vector<1x256xf32>
    %540 = arith.mulf %539, %538 : vector<1x256xf32>
    %541 = arith.addf %531, %540 : vector<1x256xf32>
    %c76 = arith.constant 76 : index
    %542 = memref.load %arg5[%c76] : memref<98xf32, #tpu.memory_space<smem>>
    %c1_225 = arith.constant 1 : index
    %c67_226 = arith.constant 67 : index
    %543 = vector.load %arg8[%c1_225, %c67_226] : memref<2x384xf32, #tpu.memory_space<vmem>>, vector<1x256xf32>
    %544 = vector.broadcast %542 : f32 to vector<1x256xf32>
    %545 = arith.mulf %544, %543 : vector<1x256xf32>
    %546 = arith.addf %536, %545 : vector<1x256xf32>
    %c34_227 = arith.constant 34 : index
    %547 = memref.load %arg5[%c34_227] : memref<98xf32, #tpu.memory_space<smem>>
    %c0_228 = arith.constant 0 : index
    %c83 = arith.constant 83 : index
    %548 = vector.load %arg8[%c0_228, %c83] : memref<2x384xf32, #tpu.memory_space<vmem>>, vector<1x256xf32>
    %549 = vector.broadcast %547 : f32 to vector<1x256xf32>
    %550 = arith.mulf %549, %548 : vector<1x256xf32>
    %551 = arith.addf %541, %550 : vector<1x256xf32>
    %c83_229 = arith.constant 83 : index
    %552 = memref.load %arg5[%c83_229] : memref<98xf32, #tpu.memory_space<smem>>
    %c1_230 = arith.constant 1 : index
    %c83_231 = arith.constant 83 : index
    %553 = vector.load %arg8[%c1_230, %c83_231] : memref<2x384xf32, #tpu.memory_space<vmem>>, vector<1x256xf32>
    %554 = vector.broadcast %552 : f32 to vector<1x256xf32>
    %555 = arith.mulf %554, %553 : vector<1x256xf32>
    %556 = arith.addf %546, %555 : vector<1x256xf32>
    %c41 = arith.constant 41 : index
    %557 = memref.load %arg5[%c41] : memref<98xf32, #tpu.memory_space<smem>>
    %c0_232 = arith.constant 0 : index
    %c99 = arith.constant 99 : index
    %558 = vector.load %arg8[%c0_232, %c99] : memref<2x384xf32, #tpu.memory_space<vmem>>, vector<1x256xf32>
    %559 = vector.broadcast %557 : f32 to vector<1x256xf32>
    %560 = arith.mulf %559, %558 : vector<1x256xf32>
    %561 = arith.addf %551, %560 : vector<1x256xf32>
    %c90 = arith.constant 90 : index
    %562 = memref.load %arg5[%c90] : memref<98xf32, #tpu.memory_space<smem>>
    %c1_233 = arith.constant 1 : index
    %c99_234 = arith.constant 99 : index
    %563 = vector.load %arg8[%c1_233, %c99_234] : memref<2x384xf32, #tpu.memory_space<vmem>>, vector<1x256xf32>
    %564 = vector.broadcast %562 : f32 to vector<1x256xf32>
    %565 = arith.mulf %564, %563 : vector<1x256xf32>
    %566 = arith.addf %556, %565 : vector<1x256xf32>
    %c48_235 = arith.constant 48 : index
    %567 = memref.load %arg5[%c48_235] : memref<98xf32, #tpu.memory_space<smem>>
    %c0_236 = arith.constant 0 : index
    %c115 = arith.constant 115 : index
    %568 = vector.load %arg8[%c0_236, %c115] : memref<2x384xf32, #tpu.memory_space<vmem>>, vector<1x256xf32>
    %569 = vector.broadcast %567 : f32 to vector<1x256xf32>
    %570 = arith.mulf %569, %568 : vector<1x256xf32>
    %571 = arith.addf %561, %570 : vector<1x256xf32>
    %c97_237 = arith.constant 97 : index
    %572 = memref.load %arg5[%c97_237] : memref<98xf32, #tpu.memory_space<smem>>
    %c1_238 = arith.constant 1 : index
    %c115_239 = arith.constant 115 : index
    %573 = vector.load %arg8[%c1_238, %c115_239] : memref<2x384xf32, #tpu.memory_space<vmem>>, vector<1x256xf32>
    %574 = vector.broadcast %572 : f32 to vector<1x256xf32>
    %575 = arith.mulf %574, %573 : vector<1x256xf32>
    %576 = arith.addf %566, %575 : vector<1x256xf32>
    %c6_240 = arith.constant 6 : index
    %c0_241 = arith.constant 0 : index
    %577 = vector.load %arg4[%c6_240, %c0_241] : memref<7x256xf32, #tpu.memory_space<vmem>>, vector<1x256xf32>
    %578 = arith.addf %571, %576 : vector<1x256xf32>
    %579 = arith.mulf %577, %578 : vector<1x256xf32>
    %580 = arith.addf %504, %579 : vector<1x256xf32>
    %c0_242 = arith.constant 0 : index
    %581 = memref.load %arg6[%c0_242] : memref<1xf32, #tpu.memory_space<smem>>
    %582 = vector.broadcast %581 : f32 to vector<1x256xf32>
    %583 = arith.addf %580, %582 : vector<1x256xf32>
    %584 = arith.negf %583 : vector<1x256xf32>
    %585 = math.exp %584 : vector<1x256xf32>
    %cst_243 = arith.constant 1.000000e+00 : f32
    %586 = vector.broadcast %cst_243 : f32 to vector<1x256xf32>
    %587 = arith.addf %586, %585 : vector<1x256xf32>
    %588 = arith.divf %586, %587 : vector<1x256xf32>
    %589 = vector.shape_cast %36 : vector<1x32xf32> to vector<1x32x1xf32>
    %590 = vector.shape_cast %588 : vector<1x256xf32> to vector<1x1x256xf32>
    %591 = vector.broadcast %589 : vector<1x32x1xf32> to vector<1x32x256xf32>
    %592 = vector.broadcast %590 : vector<1x1x256xf32> to vector<1x32x256xf32>
    %593 = arith.mulf %591, %592 : vector<1x32x256xf32>
    %594 = arith.mulf %0, %593 : vector<1x32x256xf32>
    %c0_244 = arith.constant 0 : index
    %c0_245 = arith.constant 0 : index
    %c0_246 = arith.constant 0 : index
    %595 = vector.load %arg7[%c0_244, %c0_245, %c0_246] : memref<1x32x256xf32, #tpu.memory_space<vmem>>, vector<1x32x256xf32>
    tpu.vector_store %arg7[%c0_244, %c0_245, %c0_246], %594 {strides = array<i32>} : memref<1x32x256xf32, #tpu.memory_space<vmem>>, vector<1x32x256xf32>,
    return
  }
  func.func @transform_0(%arg0: i32) -> (i32, i32, i32) {
    %c0_i32 = arith.constant 0 : i32
    %c0_i32_0 = arith.constant 0 : i32
    %c0_i32_1 = arith.constant 0 : i32
    return %arg0, %c0_i32, %c0_i32_0 : i32, i32, i32
  }
  func.func @transform_1(%arg0: i32) -> (i32, i32) {
    %c0_i32 = arith.constant 0 : i32
    %c0_i32_0 = arith.constant 0 : i32
    %c0_i32_1 = arith.constant 0 : i32
    return %c0_i32, %c0_i32_0 : i32, i32
  }
  func.func @transform_2(%arg0: i32) -> (i32, i32) {
    %c0_i32 = arith.constant 0 : i32
    %c0_i32_0 = arith.constant 0 : i32
    %c0_i32_1 = arith.constant 0 : i32
    return %c0_i32, %c0_i32_0 : i32, i32
  }
  func.func @transform_3(%arg0: i32) -> (i32, i32) {
    %c0_i32 = arith.constant 0 : i32
    %c0_i32_0 = arith.constant 0 : i32
    %c0_i32_1 = arith.constant 0 : i32
    return %c0_i32, %c0_i32_0 : i32, i32
  }
  func.func @transform_4(%arg0: i32) -> i32 {
    %c0_i32 = arith.constant 0 : i32
    %c0_i32_0 = arith.constant 0 : i32
    return %c0_i32 : i32
  }
  func.func @transform_5(%arg0: i32) -> i32 {
    %c0_i32 = arith.constant 0 : i32
    %c0_i32_0 = arith.constant 0 : i32
    return %c0_i32 : i32
  }
  func.func @transform_6(%arg0: i32) -> (i32, i32, i32) {
    %c0_i32 = arith.constant 0 : i32
    %c0_i32_0 = arith.constant 0 : i32
    %c0_i32_1 = arith.constant 0 : i32
    return %arg0, %c0_i32, %c0_i32_0 : i32, i32, i32
  }
}

</mosaic_0001>

<llo_original>
// kernel: cbam_pallas.1
$region0: #{cbam_pallas.1}
  #allocation0 [shape = 'u32[]', space=smem, size = 0x4, offset = 0x4, fixed_abs, tag = 'smem constant byte address 0x4 - core index']
  #allocation1 [shape = 'u32[144,128]{1,0:T(1,128)}', space=vmem, size = 0x12000, scoped, tag = 'internal scratch']
  #allocation2 [shape = 'f32[2,384]{1,0:T(2,128)}', space=vmem, size = 0xc00, scoped, tag = 'scratch operand']
  #allocation3 [shape = 'f32[1]{0:T(128)S(6)}', space=smem, size = 0x200, scoped, tag = 'scoped memory for cbam_pallas.1']
  %s0 = inlined_call_operand.vmem [shape: f32[2,32,256], index: 0, kind: input, shape index: {}]
  %s1 = inlined_call_operand.vmem [shape: f32[2,32], index: 1, kind: input, shape index: {}]
  %s2 = inlined_call_operand.vmem [shape: f32[2,32], index: 2, kind: input, shape index: {}]
  %s3 = inlined_call_operand.vmem [shape: f32[7,256], index: 3, kind: input, shape index: {}]
  %s4 = inlined_call_operand.vmem [shape: f32[98], index: 4, kind: input, shape index: {}]
  %s5 = inlined_call_operand.<no memory space> [shape: f32[1], index: 5, kind: input, shape index: {}]
  %s6 = inlined_call_operand.vmem [shape: f32[2,32,256], index: 6, kind: output, shape index: {}]
  %s7 = sld [smem:[#allocation0]]
  $region61: #{cbam_pallas.1} parent=0
    _
  %s9 = ssub.s32 1, %s7
  %s10 = scalar_select 0, %s9, %s7
  %11 = sst [smem:[#allocation3]] %s5
  $region1: #{cbam_pallas.1} parent=0
    #allocation4 [shape = 'u8[512]{0}', space=smem, size = 0x200, scoped, tag = 'input window, operand 4, single buffered']
    #allocation5 [shape = 's32[2]{0}', space=sflag, size = 0x8, scoped, tag = 'scoped memory for cbam_pallas.1']
    %12 = vsyncpa [#allocation5], 0
    loop: start=0, step=1, limit=4
    $region2: #{cbam_pallas.1} parent=1 // loop_pre_header
      _
    $region3: #{cbam_pallas.1} parent=1 // loop_header
      %s14 = sphi 0, %s18
      %p15 = scmp.ge.s32.totalorder %s14, 4
      %s24 = sphi 0, %s26
      %s27 = sphi 0, %s24
      %s28 = sphi 0, %s27
      %s44 = sphi 0, %s28
      %s48 = sphi 0, %s48
      %s50 = sphi 0, %s48
      %s51 = sphi 0, %s50
      %s65 = sphi 0, %s51
      %s69 = sphi 0, %s69
      %s71 = sphi 0, %s69
      %s72 = sphi 0, %s71
      %s86 = sphi 0, %s72
      %s90 = sphi 0, %s90
      %s92 = sphi 0, %s90
      %s93 = sphi 0, %s92
      %s107 = sphi 0, %s93
      %s111 = sphi 0, %s111
      %s113 = sphi 0, %s111
      %s114 = sphi 0, %s113
      %s128 = sphi 0, %s114
      %s132 = sphi 0, %s132
      %s134 = sphi 0, %s132
      %s135 = sphi 0, %s134
      %s149 = sphi 0, %s135
      %s155 = sphi 0, %s157
      %s158 = sphi 0, %s155
      %s159 = sphi 0, %s158
      %s175 = sphi 0, %s159
    $region4: #{cbam_pallas.1} parent=1 // loop_header_branch
      %17 = sbr.rel (%p15) target = $region8
    $region5: #{cbam_pallas.1} parent=1 // loop_body
      %s19 = ssub.s32 %s14, 1
      %s20 = ssub.s32 %s14, 2
      %s21 = sadd.s32 %s14, 1
      %s22 = ssub.s32 %s14, %s21
      %p23 = scmp.eq.s32.totalorder %s22, 0
      %s25 = sadd.s32 %s24, 1
      %s26 = scalar_select %p23, %s24, %s25
      %p29 = pneg %p23
      %p30 = scmp.eq.s32.totalorder %s14, 1
      %p31 = por %p29, %p30
      %p32 = scmp.ne.s32.totalorder %s24, %s27
      %p33 = scmp.eq.s32.totalorder %s14, 0
      %p34 = por %p32, %p33
      %p35 = scmp.ne.s32.totalorder %s24, %s27
      %p36 = scmp.eq.s32.totalorder %s19, 1
      %p37 = por %p35, %p36
      %p38 = scmp.ne.s32.totalorder %s27, %s28
      %p39 = scmp.eq.s32.totalorder %s19, 0
      %p40 = por %p38, %p39
      %p41 = scmp.ne.s32.totalorder %s27, %s28
      %p42 = scmp.eq.s32.totalorder %s20, 1
      %p43 = por %p41, %p42
      %p45 = scmp.ne.s32.totalorder %s28, %s44
      %p46 = scmp.eq.s32.totalorder %s20, 0
      %p47 = por %p45, %p46
      %s49 = sadd.s32 %s48, 1
      %p52 = scmp.eq.s32.totalorder %s14, 1
      %p53 = scmp.ne.s32.totalorder %s48, %s50
      %p54 = scmp.eq.s32.totalorder %s14, 0
      %p55 = por %p53, %p54
      %p56 = scmp.ne.s32.totalorder %s48, %s50
      %p57 = scmp.eq.s32.totalorder %s19, 1
      %p58 = por %p56, %p57
      %p59 = scmp.ne.s32.totalorder %s50, %s51
      %p60 = scmp.eq.s32.totalorder %s19, 0
      %p61 = por %p59, %p60
      %p62 = scmp.ne.s32.totalorder %s50, %s51
      %p63 = scmp.eq.s32.totalorder %s20, 1
      %p64 = por %p62, %p63
      %p66 = scmp.ne.s32.totalorder %s51, %s65
      %p67 = scmp.eq.s32.totalorder %s20, 0
      %p68 = por %p66, %p67
      %s70 = sadd.s32 %s69, 1
      %p73 = scmp.eq.s32.totalorder %s14, 1
      %p74 = scmp.ne.s32.totalorder %s69, %s71
      %p75 = scmp.eq.s32.totalorder %s14, 0
      %p76 = por %p74, %p75
      %p77 = scmp.ne.s32.totalorder %s69, %s71
      %p78 = scmp.eq.s32.totalorder %s19, 1
      %p79 = por %p77, %p78
      %p80 = scmp.ne.s32.totalorder %s71, %s72
      %p81 = scmp.eq.s32.totalorder %s19, 0
      %p82 = por %p80, %p81
      %p83 = scmp.ne.s32.totalorder %s71, %s72
      %p84 = scmp.eq.s32.totalorder %s20, 1
      %p85 = por %p83, %p84
      %p87 = scmp.ne.s32.totalorder %s72, %s86
      %p88 = scmp.eq.s32.totalorder %s20, 0
      %p89 = por %p87, %p88
      %s91 = sadd.s32 %s90, 1
      %p94 = scmp.eq.s32.totalorder %s14, 1
      %p95 = scmp.ne.s32.totalorder %s90, %s92
      %p96 = scmp.eq.s32.totalorder %s14, 0
      %p97 = por %p95, %p96
      %p98 = scmp.ne.s32.totalorder %s90, %s92
      %p99 = scmp.eq.s32.totalorder %s19, 1
      %p100 = por %p98, %p99
      %p101 = scmp.ne.s32.totalorder %s92, %s93
      %p102 = scmp.eq.s32.totalorder %s19, 0
      %p103 = por %p101, %p102
      %p104 = scmp.ne.s32.totalorder %s92, %s93
      %p105 = scmp.eq.s32.totalorder %s20, 1
      %p106 = por %p104, %p105
      %p108 = scmp.ne.s32.totalorder %s93, %s107
      %p109 = scmp.eq.s32.totalorder %s20, 0
      %p110 = por %p108, %p109
      %s112 = sadd.s32 %s111, 1
      %p115 = scmp.eq.s32.totalorder %s14, 1
      %p116 = scmp.ne.s32.totalorder %s111, %s113
      %p117 = scmp.eq.s32.totalorder %s14, 0
      %p118 = por %p116, %p117
      %p119 = scmp.ne.s32.totalorder %s111, %s113
      %p120 = scmp.eq.s32.totalorder %s19, 1
      %p121 = por %p119, %p120
      %p122 = scmp.ne.s32.totalorder %s113, %s114
      %p123 = scmp.eq.s32.totalorder %s19, 0
      %p124 = por %p122, %p123
      %p125 = scmp.ne.s32.totalorder %s113, %s114
      %p126 = scmp.eq.s32.totalorder %s20, 1
      %p127 = por %p125, %p126
      %p129 = scmp.ne.s32.totalorder %s114, %s128
      %p130 = scmp.eq.s32.totalorder %s20, 0
      %p131 = por %p129, %p130
      %s133 = sadd.s32 %s132, 1
      %p136 = scmp.eq.s32.totalorder %s14, 1
      %p137 = scmp.ne.s32.totalorder %s132, %s134
      %p138 = scmp.eq.s32.totalorder %s14, 0
      %p139 = por %p137, %p138
      %p140 = scmp.ne.s32.totalorder %s132, %s134
      %p141 = scmp.eq.s32.totalorder %s19, 1
      %p142 = por %p140, %p141
      %p143 = scmp.ne.s32.totalorder %s134, %s135
      %p144 = scmp.eq.s32.totalorder %s19, 0
      %p145 = por %p143, %p144
      %p146 = scmp.ne.s32.totalorder %s134, %s135
      %p147 = scmp.eq.s32.totalorder %s20, 1
      %p148 = por %p146, %p147
      %p150 = scmp.ne.s32.totalorder %s135, %s149
      %p151 = scmp.eq.s32.totalorder %s20, 0
      %p152 = por %p150, %p151
      %s153 = ssub.s32 %s14, %s21
      %p154 = scmp.eq.s32.totalorder %s153, 0
      %s156 = sadd.s32 %s155, 1
      %s157 = scalar_select %p154, %s155, %s156
      %p160 = pneg %p154
      %p161 = scmp.eq.s32.totalorder %s14, 1
      %p162 = por %p160, %p161
      %p163 = scmp.ne.s32.totalorder %s155, %s158
      %p164 = scmp.eq.s32.totalorder %s14, 0
      %p165 = por %p163, %p164
      %p166 = scmp.ne.s32.totalorder %s155, %s158
      %p167 = scmp.eq.s32.totalorder %s19, 1
      %p168 = por %p166, %p167
      %p169 = scmp.ne.s32.totalorder %s158, %s159
      %p170 = scmp.eq.s32.totalorder %s19, 0
      %p171 = por %p169, %p170
      %p172 = scmp.ne.s32.totalorder %s158, %s159
      %p173 = scmp.eq.s32.totalorder %s20, 1
      %p174 = por %p172, %p173
      %p176 = scmp.ne.s32.totalorder %s159, %s175
      %p177 = scmp.eq.s32.totalorder %s20, 0
      %p178 = por %p176, %p177
      %p179 = scmp.le.s32.totalorder 1, %s14
      %p180 = scmp.lt.s32.totalorder %s14, 3
      %p181 = pnand %p179, %p180
      %p182 = pneg %p181
      // Predicated region
      $region9: #{cbam_pallas.1} parent=5 // pred_check
        _
      $region10: #{cbam_pallas.1} parent=5 // pred_check_branch
        %184 = sbr.rel (%p181) target = $region12
      $region11: #{cbam_pallas.1} parent=5 // pred_region
        %s185 = ssub.s32 %s14, 1
        // Predicated region
        $region13: #{cbam_pallas.1} parent=11 // pred_check
          %p186 = pneg %p61
        $region14: #{cbam_pallas.1} parent=11 // pred_check_branch
          %188 = sbr.rel (%p186) target = $region16
        $region15: #{cbam_pallas.1} parent=11 // pred_region
          _
        $region16: #{cbam_pallas.1} parent=11 // pred_fallthru
          _
        // Predicated region
        $region17: #{cbam_pallas.1} parent=11 // pred_check
          %p189 = pneg %p82
        $region18: #{cbam_pallas.1} parent=11 // pred_check_branch
          %191 = sbr.rel (%p189) target = $region20
        $region19: #{cbam_pallas.1} parent=11 // pred_region
          _
        $region20: #{cbam_pallas.1} parent=11 // pred_fallthru
          _
        // Predicated region
        $region21: #{cbam_pallas.1} parent=11 // pred_check
          %p192 = pneg %p103
        $region22: #{cbam_pallas.1} parent=11 // pred_check_branch
          %194 = sbr.rel (%p192) target = $region24
        $region23: #{cbam_pallas.1} parent=11 // pred_region
          _
        $region24: #{cbam_pallas.1} parent=11 // pred_fallthru
          _
        // Predicated region
        $region25: #{cbam_pallas.1} parent=11 // pred_check
          %p195 = pneg %p124
        $region26: #{cbam_pallas.1} parent=11 // pred_check_branch
          %197 = sbr.rel (%p195) target = $region28
        $region27: #{cbam_pallas.1} parent=11 // pred_region
          %s199 = ssub.s32 16, 16
          %200 = vsyncadd [#allocation5], %s199
          %s202 = sshll.u32 %s4, 4
          %s203 = int_to_ptr.vmem [resolvable:$true] %s202
          %205 = dma.vmem_to_smem %s203, 16, [#allocation4], [#allocation5]
        $region28: #{cbam_pallas.1} parent=11 // pred_fallthru
          _
        // Predicated region
        $region29: #{cbam_pallas.1} parent=11 // pred_check
          %p206 = pneg %p145
        $region30: #{cbam_pallas.1} parent=11 // pred_check_branch
          %208 = sbr.rel (%p206) target = $region32
        $region31: #{cbam_pallas.1} parent=11 // pred_region
          _
        $region32: #{cbam_pallas.1} parent=11 // pred_fallthru
          _
      $region12: #{cbam_pallas.1} parent=5 // pred_fallthru
        _
      %p209 = scmp.lt.s32.totalorder %s14, 2
      // Predicated region
      $region33: #{cbam_pallas.1} parent=5 // pred_check
        %p210 = pneg %p209
      $region34: #{cbam_pallas.1} parent=5 // pred_check_branch
        %212 = sbr.rel (%p210) target = $region36
      $region35: #{cbam_pallas.1} parent=5 // pred_region
        // Predicated region
        $region37: #{cbam_pallas.1} parent=35 // pred_check
          %p213 = pneg %p34
        $region38: #{cbam_pallas.1} parent=35 // pred_check_branch
          %215 = sbr.rel (%p213) target = $region40
        $region39: #{cbam_pallas.1} parent=35 // pred_region
          %p216 = scmp.lt.s32.totalorder %s14, 1
          %s217 = scalar_select %p216, %s14, 1
          %s218 = smul.addr %s217, 8
          %s219 = smul.addr %s218, 8
          %s220 = scalar_lea.vmem %s0, %s219
        $region40: #{cbam_pallas.1} parent=35 // pred_fallthru
          _
      $region36: #{cbam_pallas.1} parent=5 // pred_fallthru
        _
      %p221 = scmp.le.s32.totalorder 1, %s14
      %p222 = scmp.lt.s32.totalorder %s14, 3
      %p223 = pnand %p221, %p222
      %p224 = pneg %p223
      // Predicated region
      $region41: #{cbam_pallas.1} parent=5 // pred_check
        _
      $region42: #{cbam_pallas.1} parent=5 // pred_check_branch
        %226 = sbr.rel (%p223) target = $region44
      $region43: #{cbam_pallas.1} parent=5 // pred_region
        %s227 = ssub.s32 %s14, 1
        // Predicated region
        $region45: #{cbam_pallas.1} parent=43 // pred_check
          %p228 = pneg %p124
        $region46: #{cbam_pallas.1} parent=43 // pred_check_branch
          %230 = sbr.rel (%p228) target = $region48
        $region47: #{cbam_pallas.1} parent=43 // pred_region
          %231 = dma.done [#allocation5], 16
        $region48: #{cbam_pallas.1} parent=43 // pred_fallthru
          _
        %232 = sfence
        %p233 = scmp.lt.s32.totalorder %s19, 1
        %s234 = scalar_select %p233, %s19, 1
        %s235 = smul.addr %s234, 8
        %s236 = smul.addr %s235, 8
        %s237 = scalar_lea.vmem %s0, %s236
        %p238 = pneg %p40
        %p239 = pneg %p37
        %p240 = pneg %p61
        %p241 = pneg %p58
        %p242 = pneg %p82
        %p243 = pneg %p79
        %p244 = pneg %p103
        %p245 = pneg %p100
        %p246 = pneg %p124
        %p247 = pneg %p121
        %p248 = pneg %p145
        %p249 = pneg %p142
        %p250 = pneg %p171
        %p251 = pneg %p168
        %p252 = scmp.lt.s32.totalorder %s19, 1
        %s253 = scalar_select %p252, %s19, 1
        %s254 = smul.addr %s253, 8
        %s255 = smul.addr %s254, 8
        %s256 = scalar_lea.vmem %s6, %s255
        %p257 = scmp.lt.s32.totalorder %s19, 1
        %s258 = scalar_select %p257, %s19, 1
        %s259 = smul.addr %s258, 8
        %s260 = smul.addr %s259, 8
        %s261 = scalar_lea.vmem %s0, %s260
        %p262 = scmp.lt.s32.totalorder %s19, 1
        %s263 = scalar_select %p262, %s19, 1
        %s264 = smul.addr %s263, 8
        %s265 = smul.addr %s264, 8
        %s266 = scalar_lea.vmem %s6, %s265
        %v267 = vld [vmem:[%s261] sm:$0xff]
        %v268 = vld [vmem:[%s261 + $0x8] sm:$0xff]
        %v269 = vld [vmem:[%s261 + $0x10] sm:$0xff]
        %v270 = vld [vmem:[%s261 + $0x18] sm:$0xff]
        %v271 = vld [vmem:[%s261 + $0x20] sm:$0xff]
        %v272 = vld [vmem:[%s261 + $0x28] sm:$0xff]
        %v273 = vld [vmem:[%s261 + $0x30] sm:$0xff]
        %v274 = vld [vmem:[%s261 + $0x38] sm:$0xff]
        %v275 = vadd.f32 %v267, %v268
        %276 = vadd.xlane.f32.xlu0 %v275
        %v277 = vpop.xlane.xlu0 %276
        %v278 = vadd.f32 %v269, %v270
        %279 = vadd.xlane.f32.xlu0 %v278
        %v280 = vpop.xlane.xlu0 %279
        %v281 = vadd.f32 %v271, %v272
        %282 = vadd.xlane.f32.xlu0 %v281
        %v283 = vpop.xlane.xlu0 %282
        %v284 = vadd.f32 %v273, %v274
        %285 = vadd.xlane.f32.xlu0 %v284
        %v286 = vpop.xlane.xlu0 %285
        %v287 = vrcp.pop 256.0
        %v288 = vmul.f32 %v277, %v287
        %v289 = vmul.f32 %v280, %v287
        %v290 = vmul.f32 %v283, %v287
        %v291 = vmul.f32 %v286, %v287
        %v292 = vmax.f32 %v267, %v268
        %293 = vmax.xlane.f32.xlu0 %v292
        %v294 = vpop.xlane.xlu0 %293
        %v295 = vmax.f32 %v269, %v270
        %296 = vmax.xlane.f32.xlu0 %v295
        %v297 = vpop.xlane.xlu0 %296
        %v298 = vmax.f32 %v271, %v272
        %299 = vmax.xlane.f32.xlu0 %v298
        %v300 = vpop.xlane.xlu0 %299
        %v301 = vmax.f32 %v273, %v274
        %302 = vmax.xlane.f32.xlu0 %v301
        %v303 = vpop.xlane.xlu0 %302
        %v304 = vld [vmem:[%s1] sm:$0x3]
        %v305 = vld [vmem:[%s2] sm:$0x3]
        %v307 = vlaneseq
        %v308 = vshrl.u32 %v307, 7
        %v309 = vsub.s32 0, %v308
        %v310 = vrot.slane %v304, %v309
        %312 = vbcast.lane.b32.xlu0 %v310, 256
        %v313 = vpop.permute.xlu0 %312
        %s315 = sor.u32 256, 8
        %316 = vbcast.lane.b32.xlu0 %v310, %s315
        %v317 = vpop.permute.xlu0 %316
        %s319 = sor.u32 256, 16
        %320 = vbcast.lane.b32.xlu0 %v310, %s319
        %v321 = vpop.permute.xlu0 %320
        %s323 = sor.u32 256, 24
        %324 = vbcast.lane.b32.xlu0 %v310, %s323
        %v325 = vpop.permute.xlu0 %324
        %v326 = vlaneseq
        %v327 = vshrl.u32 %v326, 7
        %v328 = vsub.s32 1, %v327
        %v329 = vrot.slane %v304, %v328
        %331 = vbcast.lane.b32.xlu0 %v329, 256
        %v332 = vpop.permute.xlu0 %331
        %s334 = sor.u32 256, 8
        %335 = vbcast.lane.b32.xlu0 %v329, %s334
        %v336 = vpop.permute.xlu0 %335
        %s338 = sor.u32 256, 16
        %339 = vbcast.lane.b32.xlu0 %v329, %s338
        %v340 = vpop.permute.xlu0 %339
        %s342 = sor.u32 256, 24
        %343 = vbcast.lane.b32.xlu0 %v329, %s342
        %v344 = vpop.permute.xlu0 %343
        %v353 = vmul.f32 %v288, %v313
        %v354 = vmul.f32 %v289, %v317
        %v355 = vmul.f32 %v290, %v321
        %v356 = vmul.f32 %v291, %v325
        %v357 = vmul.f32 %v288, %v332
        %v358 = vmul.f32 %v289, %v336
        %v359 = vmul.f32 %v290, %v340
        %v360 = vmul.f32 %v291, %v344
        %369 = vset.pattern.permute.xlu0 0
        %370 = vperm.xlu0 %369, %v353
        %v371 = vpop.permute.xlu0 %370
        %372 = vset.pattern.permute.xlu0 0
        %373 = vperm.xlu0 %372, %v354
        %v374 = vpop.permute.xlu0 %373
        %375 = vset.pattern.permute.xlu0 0
        %376 = vperm.xlu0 %375, %v355
        %v377 = vpop.permute.xlu0 %376
        %378 = vset.pattern.permute.xlu0 0
        %379 = vperm.xlu0 %378, %v356
        %v380 = vpop.permute.xlu0 %379
        %381 = vset.pattern.permute.xlu0 0
        %382 = vperm.xlu0 %381, %v357
        %v383 = vpop.permute.xlu0 %382
        %384 = vset.pattern.permute.xlu0 0
        %385 = vperm.xlu0 %384, %v358
        %v386 = vpop.permute.xlu0 %385
        %387 = vset.pattern.permute.xlu0 0
        %388 = vperm.xlu0 %387, %v359
        %v389 = vpop.permute.xlu0 %388
        %390 = vset.pattern.permute.xlu0 0
        %391 = vperm.xlu0 %390, %v360
        %v392 = vpop.permute.xlu0 %391
        %v393 = vlaneseq
        %v394 = vand.u32 %v393, 127
        %v395 = vlaneseq
        %v396 = vshrl.u32 %v395, 7
        %v397 = vsub.s32 %v394, %v396
        %v398 = vrot.slane %v371, %v397
        %v399 = vadd.s32 %v394, 4294967288
        %v400 = vlaneseq
        %v401 = vshrl.u32 %v400, 7
        %v402 = vsub.s32 %v399, %v401
        %v403 = vrot.slane %v374, %v402
        %vm404 = vcmask 130112
        %v405 = vsel %vm404, %v403, %v398
        %v406 = vadd.s32 %v394, 4294967280
        %v407 = vlaneseq
        %v408 = vshrl.u32 %v407, 7
        %v409 = vsub.s32 %v406, %v408
        %v410 = vrot.slane %v377, %v409
        %vm411 = vcmask 195712
        %v412 = vsel %vm411, %v410, %v405
        %v413 = vadd.s32 %v394, 4294967272
        %v414 = vlaneseq
        %v415 = vshrl.u32 %v414, 7
        %v416 = vsub.s32 %v413, %v415
        %v417 = vrot.slane %v380, %v416
        %vm418 = vcmask 261312
        %v419 = vsel %vm418, %v417, %v412
        %v420 = vlaneseq
        %v421 = vshrl.u32 %v420, 7
        %v422 = vsub.s32 %v394, %v421
        %v423 = vrot.slane %v383, %v422
        %v424 = vlaneseq
        %v425 = vshrl.u32 %v424, 7
        %v426 = vsub.s32 %v399, %v425
        %v427 = vrot.slane %v386, %v426
        %v428 = vsel %vm404, %v427, %v423
        %v429 = vlaneseq
        %v430 = vshrl.u32 %v429, 7
        %v431 = vsub.s32 %v406, %v430
        %v432 = vrot.slane %v389, %v431
        %v433 = vsel %vm411, %v432, %v428
        %v434 = vlaneseq
        %v435 = vshrl.u32 %v434, 7
        %v436 = vsub.s32 %v413, %v435
        %v437 = vrot.slane %v392, %v436
        %v438 = vsel %vm418, %v437, %v433
        %vm439 = vcmask 1041409
        %v440 = vsel %vm439, %v438, %v419
        %vm442 = vcmask 254976
        %v443 = vsel %vm442, %v440, 0.0
        %444 = vadd.xlane.f32.xlu0 %v443
        %v445 = vpop.xlane.xlu0 %444
        %v446 = vmax.f32 %v445, 0.0
        %v447 = vmul.f32 %v294, %v313
        %v448 = vmul.f32 %v297, %v317
        %v449 = vmul.f32 %v300, %v321
        %v450 = vmul.f32 %v303, %v325
        %v451 = vmul.f32 %v294, %v332
        %v452 = vmul.f32 %v297, %v336
        %v453 = vmul.f32 %v300, %v340
        %v454 = vmul.f32 %v303, %v344
        %463 = vset.pattern.permute.xlu0 0
        %464 = vperm.xlu0 %463, %v447
        %v465 = vpop.permute.xlu0 %464
        %466 = vset.pattern.permute.xlu0 0
        %467 = vperm.xlu0 %466, %v448
        %v468 = vpop.permute.xlu0 %467
        %469 = vset.pattern.permute.xlu0 0
        %470 = vperm.xlu0 %469, %v449
        %v471 = vpop.permute.xlu0 %470
        %472 = vset.pattern.permute.xlu0 0
        %473 = vperm.xlu0 %472, %v450
        %v474 = vpop.permute.xlu0 %473
        %475 = vset.pattern.permute.xlu0 0
        %476 = vperm.xlu0 %475, %v451
        %v477 = vpop.permute.xlu0 %476
        %478 = vset.pattern.permute.xlu0 0
        %479 = vperm.xlu0 %478, %v452
        %v480 = vpop.permute.xlu0 %479
        %481 = vset.pattern.permute.xlu0 0
        %482 = vperm.xlu0 %481, %v453
        %v483 = vpop.permute.xlu0 %482
        %484 = vset.pattern.permute.xlu0 0
        %485 = vperm.xlu0 %484, %v454
        %v486 = vpop.permute.xlu0 %485
        %v487 = vlaneseq
        %v488 = vshrl.u32 %v487, 7
        %v489 = vsub.s32 %v394, %v488
        %v490 = vrot.slane %v465, %v489
        %v491 = vlaneseq
        %v492 = vshrl.u32 %v491, 7
        %v493 = vsub.s32 %v399, %v492
        %v494 = vrot.slane %v468, %v493
        %v495 = vsel %vm404, %v494, %v490
        %v496 = vlaneseq
        %v497 = vshrl.u32 %v496, 7
        %v498 = vsub.s32 %v406, %v497
        %v499 = vrot.slane %v471, %v498
        %v500 = vsel %vm411, %v499, %v495
        %v501 = vlaneseq
        %v502 = vshrl.u32 %v501, 7
        %v503 = vsub.s32 %v413, %v502
        %v504 = vrot.slane %v474, %v503
        %v505 = vsel %vm418, %v504, %v500
        %v506 = vlaneseq
        %v507 = vshrl.u32 %v506, 7
        %v508 = vsub.s32 %v394, %v507
        %v509 = vrot.slane %v477, %v508
        %v510 = vlaneseq
        %v511 = vshrl.u32 %v510, 7
        %v512 = vsub.s32 %v399, %v511
        %v513 = vrot.slane %v480, %v512
        %v514 = vsel %vm404, %v513, %v509
        %v515 = vlaneseq
        %v516 = vshrl.u32 %v515, 7
        %v517 = vsub.s32 %v406, %v516
        %v518 = vrot.slane %v483, %v517
        %v519 = vsel %vm411, %v518, %v514
        %v520 = vlaneseq
        %v521 = vshrl.u32 %v520, 7
        %v522 = vsub.s32 %v413, %v521
        %v523 = vrot.slane %v486, %v522
        %v524 = vsel %vm418, %v523, %v519
        %v525 = vsel %vm439, %v524, %v505
        %v527 = vsel %vm442, %v525, 0.0
        %528 = vadd.xlane.f32.xlu0 %v527
        %v529 = vpop.xlane.xlu0 %528
        %v530 = vmax.f32 %v529, 0.0
        %v531 = vmul.f32 %v446, %v305
        %v532 = vsel %vm442, %v531, 0.0
        %v533 = vrot.slane %v532, 4
        %v534 = vadd.f32 %v532, %v533
        %v535 = vrot.slane %v534, 2
        %v536 = vadd.f32 %v534, %v535
        %v537 = vrot.slane %v536, 1
        %v538 = vadd.f32 %v536, %v537
        %v539 = vmul.f32 %v530, %v305
        %v540 = vsel %vm442, %v539, 0.0
        %v541 = vrot.slane %v540, 4
        %v542 = vadd.f32 %v540, %v541
        %v543 = vrot.slane %v542, 2
        %v544 = vadd.f32 %v542, %v543
        %v545 = vrot.slane %v544, 1
        %v546 = vadd.f32 %v544, %v545
        %v547 = vadd.f32 %v538, %v546
        %v548 = vxor.u32 %v547, 2147483648
        %v549 = vmul.f32 %v548, 1.442695
        %v550 = vpow.pop %v549
        %v551 = vadd.f32 %v550, 1.0
        %v552 = vrcp.pop %v551
        %v553 = vmul.f32 1.0, %v552
        %555 = vbcast.lane.b32.xlu0 %v553, 256
        %v556 = vpop.permute.xlu0 %555
        %s558 = sor.u32 256, 8
        %559 = vbcast.lane.b32.xlu0 %v553, %s558
        %v560 = vpop.permute.xlu0 %559
        %s562 = sor.u32 256, 16
        %563 = vbcast.lane.b32.xlu0 %v553, %s562
        %v564 = vpop.permute.xlu0 %563
        %s566 = sor.u32 256, 24
        %567 = vbcast.lane.b32.xlu0 %v553, %s566
        %v568 = vpop.permute.xlu0 %567
        %v569 = vmul.f32 %v267, %v556
        %v570 = vmul.f32 %v268, %v556
        %v571 = vmul.f32 %v269, %v560
        %v572 = vmul.f32 %v270, %v560
        %v573 = vmul.f32 %v271, %v564
        %v574 = vmul.f32 %v272, %v564
        %v575 = vmul.f32 %v273, %v568
        %v576 = vmul.f32 %v274, %v568
        %v577 = vadd.f32 %v569, %v571
        %v578 = vadd.f32 %v577, %v573
        %v579 = vadd.f32 %v578, %v575
        %v580 = vrot.slane %v579, 4
        %v581 = vadd.f32 %v579, %v580
        %v582 = vrot.slane %v581, 2
        %v583 = vadd.f32 %v581, %v582
        %v584 = vrot.slane %v583, 1
        %v585 = vadd.f32 %v583, %v584
        %v586 = vadd.f32 %v570, %v572
        %v587 = vadd.f32 %v586, %v574
        %v588 = vadd.f32 %v587, %v576
        %v589 = vrot.slane %v588, 4
        %v590 = vadd.f32 %v588, %v589
        %v591 = vrot.slane %v590, 2
        %v592 = vadd.f32 %v590, %v591
        %v593 = vrot.slane %v592, 1
        %v594 = vadd.f32 %v592, %v593
        %v595 = vrcp.pop 32.0
        %v596 = vmul.f32 %v585, %v595
        %v597 = vmul.f32 %v594, %v595
        %v598 = vmax.f32 %v569, %v573
        %v599 = vmax.f32 %v571, %v575
        %v600 = vmax.f32 %v598, %v599
        %v601 = vrot.slane %v600, 4
        %v602 = vmax.f32 %v600, %v601
        %v603 = vrot.slane %v602, 2
        %v604 = vmax.f32 %v602, %v603
        %v605 = vrot.slane %v604, 1
        %v606 = vmax.f32 %v604, %v605
        %v607 = vmax.f32 %v570, %v574
        %v608 = vmax.f32 %v572, %v576
        %v609 = vmax.f32 %v607, %v608
        %v610 = vrot.slane %v609, 4
        %v611 = vmax.f32 %v609, %v610
        %v612 = vrot.slane %v611, 2
        %v613 = vmax.f32 %v611, %v612
        %v614 = vrot.slane %v613, 1
        %v615 = vmax.f32 %v613, %v614
        %616 = vst [vmem:[#allocation2] sm:$0x3f] 0.0
        %v619 = vcombine.low %v596, %v597
        %v621 = vunpack.c.l.s4 1966171168
        %v622 = vunpack.c.0.s8 %v621
        %v623 = vlaneseq
        %v624 = vshrl.u32 %v623, 7
        %v625 = vsub.s32 %v622, %v624
        %v626 = vrot.slane %v619, %v625
        %v628 = vunpack.c.l.s4 1966171168
        %v629 = vunpack.c.0.s8 %v628
        %v630 = vlaneseq
        %v631 = vshrl.u32 %v630, 7
        %v632 = vsub.s32 %v629, %v631
        %v633 = vrot.slane %v626, %v632
        %634 = vrot.lane.b32.xlu0 %v633, 64
        %v635 = vpop.permute.xlu0 %634
        %v636 = vrot.slane %v635, 7
        %vm637 = vcmask 523264
        %v638 = vsel %vm637, %v636, %v635
        %v640 = vlaneseq
        %vm641 = vcmp.ge.s32.totalorder %v640, 64
        %vm642 = vcmp.lt.s32.totalorder %v640, 320
        %vm643 = vmand %vm641, %vm642
        %644 = vst.msk [vmem:[#allocation2] ss:$2 sm:$0x7] %vm643, %v638
        %v647 = vcombine.low %v606, %v615
        %v649 = vunpack.c.l.s4 1966171168
        %v650 = vunpack.c.0.s8 %v649
        %v651 = vlaneseq
        %v652 = vshrl.u32 %v651, 7
        %v653 = vsub.s32 %v650, %v652
        %v654 = vrot.slane %v647, %v653
        %v656 = vunpack.c.l.s4 1966171168
        %v657 = vunpack.c.0.s8 %v656
        %v658 = vlaneseq
        %v659 = vshrl.u32 %v658, 7
        %v660 = vsub.s32 %v657, %v659
        %v661 = vrot.slane %v654, %v660
        %662 = vrot.lane.b32.xlu0 %v661, 64
        %v663 = vpop.permute.xlu0 %662
        %v664 = vrot.slane %v663, 7
        %v665 = vsel %vm637, %v664, %v663
        %s667 = scalar_lea.vmem [#allocation2], 1
        %668 = vst.msk [vmem:[%s667] ss:$2 sm:$0x7] %vm643, %v665
        %s669 = sld [smem:[#allocation4]]
        %v670 = vld [vmem:[#allocation2] ss:$2 sm:$0x7]
        %v671 = vstv %s669
        %v672 = vmul.f32 %v671, %v670
        %v673 = vadd.f32 %v672, 0.0
        %s674 = sld [smem:[#allocation4 + $0x31]]
        %v675 = vld [vmem:[%s667] ss:$2 sm:$0x7]
        %v676 = vstv %s674
        %v677 = vmul.f32 %v676, %v675
        %v678 = vadd.f32 %v677, 0.0
        %s679 = sld [smem:[#allocation4 + $0x7]]
        %v680 = vstv %s679
        %v681 = vmul.f32 %v680, %v670
        %683 = vrot.lane.b32.xlu0 %v681, 112
        %v684 = vpop.permute.xlu0 %683
        %v685 = vrot.slane %v684, 1
        %vm686 = vcmask 916480
        %v687 = vsel %vm686, %v684, %v685
        %v689 = vadd.f32 %v673, %v687
        %s690 = sld [smem:[#allocation4 + $0x38]]
        %v691 = vstv %s690
        %v692 = vmul.f32 %v691, %v675
        %694 = vrot.lane.b32.xlu0 %v692, 112
        %v695 = vpop.permute.xlu0 %694
        %v696 = vrot.slane %v695, 1
        %v697 = vsel %vm686, %v695, %v696
        %v699 = vadd.f32 %v678, %v697
        %s700 = sld [smem:[#allocation4 + $0xe]]
        %v701 = vstv %s700
        %v702 = vmul.f32 %v701, %v670
        %704 = vrot.lane.b32.xlu0 %v702, 96
        %v705 = vpop.permute.xlu0 %704
        %v706 = vrot.slane %v705, 1
        %vm707 = vcmask 785408
        %v708 = vsel %vm707, %v705, %v706
        %v710 = vadd.f32 %v689, %v708
        %s711 = sld [smem:[#allocation4 + $0x3f]]
        %v712 = vstv %s711
        %v713 = vmul.f32 %v712, %v675
        %715 = vrot.lane.b32.xlu0 %v713, 96
        %v716 = vpop.permute.xlu0 %715
        %v717 = vrot.slane %v716, 1
        %v718 = vsel %vm707, %v716, %v717
        %v720 = vadd.f32 %v699, %v718
        %s721 = sld [smem:[#allocation4 + $0x15]]
        %v722 = vstv %s721
        %v723 = vmul.f32 %v722, %v670
        %725 = vrot.lane.b32.xlu0 %v723, 80
        %v726 = vpop.permute.xlu0 %725
        %v727 = vrot.slane %v726, 1
        %vm728 = vcmask 654336
        %v729 = vsel %vm728, %v726, %v727
        %v731 = vadd.f32 %v710, %v729
        %s732 = sld [smem:[#allocation4 + $0x46]]
        %v733 = vstv %s732
        %v734 = vmul.f32 %v733, %v675
        %736 = vrot.lane.b32.xlu0 %v734, 80
        %v737 = vpop.permute.xlu0 %736
        %v738 = vrot.slane %v737, 1
        %v739 = vsel %vm728, %v737, %v738
        %v741 = vadd.f32 %v720, %v739
        %s742 = sld [smem:[#allocation4 + $0x1c]]
        %v743 = vstv %s742
        %v744 = vmul.f32 %v743, %v670
        %746 = vrot.lane.b32.xlu0 %v744, 64
        %v747 = vpop.permute.xlu0 %746
        %v748 = vrot.slane %v747, 1
        %v749 = vsel %vm637, %v747, %v748
        %v751 = vadd.f32 %v731, %v749
        %s752 = sld [smem:[#allocation4 + $0x4d]]
        %v753 = vstv %s752
        %v754 = vmul.f32 %v753, %v675
        %756 = vrot.lane.b32.xlu0 %v754, 64
        %v757 = vpop.permute.xlu0 %756
        %v758 = vrot.slane %v757, 1
        %v759 = vsel %vm637, %v757, %v758
        %v761 = vadd.f32 %v741, %v759
        %s762 = sld [smem:[#allocation4 + $0x23]]
        %v763 = vstv %s762
        %v764 = vmul.f32 %v763, %v670
        %766 = vrot.lane.b32.xlu0 %v764, 48
        %v767 = vpop.permute.xlu0 %766
        %v768 = vrot.slane %v767, 1
        %vm769 = vcmask 392192
        %v770 = vsel %vm769, %v767, %v768
        %v772 = vadd.f32 %v751, %v770
        %s773 = sld [smem:[#allocation4 + $0x54]]
        %v774 = vstv %s773
        %v775 = vmul.f32 %v774, %v675
        %777 = vrot.lane.b32.xlu0 %v775, 48
        %v778 = vpop.permute.xlu0 %777
        %v779 = vrot.slane %v778, 1
        %v780 = vsel %vm769, %v778, %v779
        %v782 = vadd.f32 %v761, %v780
        %s783 = sld [smem:[#allocation4 + $0x2a]]
        %v784 = vstv %s783
        %v785 = vmul.f32 %v784, %v670
        %787 = vrot.lane.b32.xlu0 %v785, 32
        %v788 = vpop.permute.xlu0 %787
        %v789 = vrot.slane %v788, 1
        %vm790 = vcmask 261120
        %v791 = vsel %vm790, %v788, %v789
        %v793 = vadd.f32 %v772, %v791
        %s794 = sld [smem:[#allocation4 + $0x5b]]
        %v795 = vstv %s794
        %v796 = vmul.f32 %v795, %v675
        %798 = vrot.lane.b32.xlu0 %v796, 32
        %v799 = vpop.permute.xlu0 %798
        %v800 = vrot.slane %v799, 1
        %v801 = vsel %vm790, %v799, %v800
        %v803 = vadd.f32 %v782, %v801
        %v804 = vld [vmem:[%s3] ss:$8 sm:$0x3]
        %v805 = vadd.f32 %v793, %v803
        %807 = vrot.lane.b32.xlu0 %v805, 115
        %v808 = vpop.permute.xlu0 %807
        %v809 = vrot.slane %v808, 1
        %vm810 = vcmask 941056
        %v811 = vsel %vm810, %v808, %v809
        %v813 = vmul.f32 %v804, %v811
        %v814 = vadd.f32 %v813, 0.0
        %s815 = sld [smem:[#allocation4 + $0x1]]
        %v816 = vstv %s815
        %v817 = vmul.f32 %v816, %v670
        %v818 = vadd.f32 %v817, 0.0
        %s819 = sld [smem:[#allocation4 + $0x32]]
        %v820 = vstv %s819
        %v821 = vmul.f32 %v820, %v675
        %v822 = vadd.f32 %v821, 0.0
        %s823 = sld [smem:[#allocation4 + $0x8]]
        %v824 = vstv %s823
        %v825 = vmul.f32 %v824, %v670
        %827 = vrot.lane.b32.xlu0 %v825, 112
        %v828 = vpop.permute.xlu0 %827
        %v829 = vrot.slane %v828, 1
        %v830 = vsel %vm686, %v828, %v829
        %v832 = vadd.f32 %v818, %v830
        %s833 = sld [smem:[#allocation4 + $0x39]]
        %v834 = vstv %s833
        %v835 = vmul.f32 %v834, %v675
        %837 = vrot.lane.b32.xlu0 %v835, 112
        %v838 = vpop.permute.xlu0 %837
        %v839 = vrot.slane %v838, 1
        %v840 = vsel %vm686, %v838, %v839
        %v842 = vadd.f32 %v822, %v840
        %s843 = sld [smem:[#allocation4 + $0xf]]
        %v844 = vstv %s843
        %v845 = vmul.f32 %v844, %v670
        %847 = vrot.lane.b32.xlu0 %v845, 96
        %v848 = vpop.permute.xlu0 %847
        %v849 = vrot.slane %v848, 1
        %v850 = vsel %vm707, %v848, %v849
        %v852 = vadd.f32 %v832, %v850
        %s853 = sld [smem:[#allocation4 + $0x40]]
        %v854 = vstv %s853
        %v855 = vmul.f32 %v854, %v675
        %857 = vrot.lane.b32.xlu0 %v855, 96
        %v858 = vpop.permute.xlu0 %857
        %v859 = vrot.slane %v858, 1
        %v860 = vsel %vm707, %v858, %v859
        %v862 = vadd.f32 %v842, %v860
        %s863 = sld [smem:[#allocation4 + $0x16]]
        %v864 = vstv %s863
        %v865 = vmul.f32 %v864, %v670
        %867 = vrot.lane.b32.xlu0 %v865, 80
        %v868 = vpop.permute.xlu0 %867
        %v869 = vrot.slane %v868, 1
        %v870 = vsel %vm728, %v868, %v869
        %v872 = vadd.f32 %v852, %v870
        %s873 = sld [smem:[#allocation4 + $0x47]]
        %v874 = vstv %s873
        %v875 = vmul.f32 %v874, %v675
        %877 = vrot.lane.b32.xlu0 %v875, 80
        %v878 = vpop.permute.xlu0 %877
        %v879 = vrot.slane %v878, 1
        %v880 = vsel %vm728, %v878, %v879
        %v882 = vadd.f32 %v862, %v880
        %s883 = sld [smem:[#allocation4 + $0x1d]]
        %v884 = vstv %s883
        %v885 = vmul.f32 %v884, %v670
        %887 = vrot.lane.b32.xlu0 %v885, 64
        %v888 = vpop.permute.xlu0 %887
        %v889 = vrot.slane %v888, 1
        %v890 = vsel %vm637, %v888, %v889
        %v892 = vadd.f32 %v872, %v890
        %s893 = sld [smem:[#allocation4 + $0x4e]]
        %v894 = vstv %s893
        %v895 = vmul.f32 %v894, %v675
        %897 = vrot.lane.b32.xlu0 %v895, 64
        %v898 = vpop.permute.xlu0 %897
        %v899 = vrot.slane %v898, 1
        %v900 = vsel %vm637, %v898, %v899
        %v902 = vadd.f32 %v882, %v900
        %s903 = sld [smem:[#allocation4 + $0x24]]
        %v904 = vstv %s903
        %v905 = vmul.f32 %v904, %v670
        %907 = vrot.lane.b32.xlu0 %v905, 48
        %v908 = vpop.permute.xlu0 %907
        %v909 = vrot.slane %v908, 1
        %v910 = vsel %vm769, %v908, %v909
        %v912 = vadd.f32 %v892, %v910
        %s913 = sld [smem:[#allocation4 + $0x55]]
        %v914 = vstv %s913
        %v915 = vmul.f32 %v914, %v675
        %917 = vrot.lane.b32.xlu0 %v915, 48
        %v918 = vpop.permute.xlu0 %917
        %v919 = vrot.slane %v918, 1
        %v920 = vsel %vm769, %v918, %v919
        %v922 = vadd.f32 %v902, %v920
        %s923 = sld [smem:[#allocation4 + $0x2b]]
        %v924 = vstv %s923
        %v925 = vmul.f32 %v924, %v670
        %927 = vrot.lane.b32.xlu0 %v925, 32
        %v928 = vpop.permute.xlu0 %927
        %v929 = vrot.slane %v928, 1
        %v930 = vsel %vm790, %v928, %v929
        %v932 = vadd.f32 %v912, %v930
        %s933 = sld [smem:[#allocation4 + $0x5c]]
        %v934 = vstv %s933
        %v935 = vmul.f32 %v934, %v675
        %937 = vrot.lane.b32.xlu0 %v935, 32
        %v938 = vpop.permute.xlu0 %937
        %v939 = vrot.slane %v938, 1
        %v940 = vsel %vm790, %v938, %v939
        %v942 = vadd.f32 %v922, %v940
        %s943 = scalar_lea.vmem %s3, 1
        %v944 = vld [vmem:[%s943] ss:$8 sm:$0x3]
        %v945 = vadd.f32 %v932, %v942
        %947 = vrot.lane.b32.xlu0 %v945, 114
        %v948 = vpop.permute.xlu0 %947
        %v949 = vrot.slane %v948, 1
        %vm950 = vcmask 932864
        %v951 = vsel %vm950, %v948, %v949
        %v953 = vmul.f32 %v944, %v951
        %v954 = vadd.f32 %v814, %v953
        %s955 = sld [smem:[#allocation4 + $0x2]]
        %v956 = vstv %s955
        %v957 = vmul.f32 %v956, %v670
        %v958 = vadd.f32 %v957, 0.0
        %s959 = sld [smem:[#allocation4 + $0x33]]
        %v960 = vstv %s959
        %v961 = vmul.f32 %v960, %v675
        %v962 = vadd.f32 %v961, 0.0
        %s963 = sld [smem:[#allocation4 + $0x9]]
        %v964 = vstv %s963
        %v965 = vmul.f32 %v964, %v670
        %967 = vrot.lane.b32.xlu0 %v965, 112
        %v968 = vpop.permute.xlu0 %967
        %v969 = vrot.slane %v968, 1
        %v970 = vsel %vm686, %v968, %v969
        %v972 = vadd.f32 %v958, %v970
        %s973 = sld [smem:[#allocation4 + $0x3a]]
        %v974 = vstv %s973
        %v975 = vmul.f32 %v974, %v675
        %977 = vrot.lane.b32.xlu0 %v975, 112
        %v978 = vpop.permute.xlu0 %977
        %v979 = vrot.slane %v978, 1
        %v980 = vsel %vm686, %v978, %v979
        %v982 = vadd.f32 %v962, %v980
        %s983 = sld [smem:[#allocation4 + $0x10]]
        %v984 = vstv %s983
        %v985 = vmul.f32 %v984, %v670
        %987 = vrot.lane.b32.xlu0 %v985, 96
        %v988 = vpop.permute.xlu0 %987
        %v989 = vrot.slane %v988, 1
        %v990 = vsel %vm707, %v988, %v989
        %v992 = vadd.f32 %v972, %v990
        %s993 = sld [smem:[#allocation4 + $0x41]]
        %v994 = vstv %s993
        %v995 = vmul.f32 %v994, %v675
        %997 = vrot.lane.b32.xlu0 %v995, 96
        %v998 = vpop.permute.xlu0 %997
        %v999 = vrot.slane %v998, 1
        %v1000 = vsel %vm707, %v998, %v999
        %v1002 = vadd.f32 %v982, %v1000
        %s1003 = sld [smem:[#allocation4 + $0x17]]
        %v1004 = vstv %s1003
        %v1005 = vmul.f32 %v1004, %v670
        %1007 = vrot.lane.b32.xlu0 %v1005, 80
        %v1008 = vpop.permute.xlu0 %1007
        %v1009 = vrot.slane %v1008, 1
        %v1010 = vsel %vm728, %v1008, %v1009
        %v1012 = vadd.f32 %v992, %v1010
        %s1013 = sld [smem:[#allocation4 + $0x48]]
        %v1014 = vstv %s1013
        %v1015 = vmul.f32 %v1014, %v675
        %1017 = vrot.lane.b32.xlu0 %v1015, 80
        %v1018 = vpop.permute.xlu0 %1017
        %v1019 = vrot.slane %v1018, 1
        %v1020 = vsel %vm728, %v1018, %v1019
        %v1022 = vadd.f32 %v1002, %v1020
        %s1023 = sld [smem:[#allocation4 + $0x1e]]
        %v1024 = vstv %s1023
        %v1025 = vmul.f32 %v1024, %v670
        %1027 = vrot.lane.b32.xlu0 %v1025, 64
        %v1028 = vpop.permute.xlu0 %1027
        %v1029 = vrot.slane %v1028, 1
        %v1030 = vsel %vm637, %v1028, %v1029
        %v1032 = vadd.f32 %v1012, %v1030
        %s1033 = sld [smem:[#allocation4 + $0x4f]]
        %v1034 = vstv %s1033
        %v1035 = vmul.f32 %v1034, %v675
        %1037 = vrot.lane.b32.xlu0 %v1035, 64
        %v1038 = vpop.permute.xlu0 %1037
        %v1039 = vrot.slane %v1038, 1
        %v1040 = vsel %vm637, %v1038, %v1039
        %v1042 = vadd.f32 %v1022, %v1040
        %s1043 = sld [smem:[#allocation4 + $0x25]]
        %v1044 = vstv %s1043
        %v1045 = vmul.f32 %v1044, %v670
        %1047 = vrot.lane.b32.xlu0 %v1045, 48
        %v1048 = vpop.permute.xlu0 %1047
        %v1049 = vrot.slane %v1048, 1
        %v1050 = vsel %vm769, %v1048, %v1049
        %v1052 = vadd.f32 %v1032, %v1050
        %s1053 = sld [smem:[#allocation4 + $0x56]]
        %v1054 = vstv %s1053
        %v1055 = vmul.f32 %v1054, %v675
        %1057 = vrot.lane.b32.xlu0 %v1055, 48
        %v1058 = vpop.permute.xlu0 %1057
        %v1059 = vrot.slane %v1058, 1
        %v1060 = vsel %vm769, %v1058, %v1059
        %v1062 = vadd.f32 %v1042, %v1060
        %s1063 = sld [smem:[#allocation4 + $0x2c]]
        %v1064 = vstv %s1063
        %v1065 = vmul.f32 %v1064, %v670
        %1067 = vrot.lane.b32.xlu0 %v1065, 32
        %v1068 = vpop.permute.xlu0 %1067
        %v1069 = vrot.slane %v1068, 1
        %v1070 = vsel %vm790, %v1068, %v1069
        %v1072 = vadd.f32 %v1052, %v1070
        %s1073 = sld [smem:[#allocation4 + $0x5d]]
        %v1074 = vstv %s1073
        %v1075 = vmul.f32 %v1074, %v675
        %1077 = vrot.lane.b32.xlu0 %v1075, 32
        %v1078 = vpop.permute.xlu0 %1077
        %v1079 = vrot.slane %v1078, 1
        %v1080 = vsel %vm790, %v1078, %v1079
        %v1082 = vadd.f32 %v1062, %v1080
        %s1083 = scalar_lea.vmem %s3, 2
        %v1084 = vld [vmem:[%s1083] ss:$8 sm:$0x3]
        %v1085 = vadd.f32 %v1072, %v1082
        %1087 = vrot.lane.b32.xlu0 %v1085, 113
        %v1088 = vpop.permute.xlu0 %1087
        %v1089 = vrot.slane %v1088, 1
        %vm1090 = vcmask 924672
        %v1091 = vsel %vm1090, %v1088, %v1089
        %v1093 = vmul.f32 %v1084, %v1091
        %v1094 = vadd.f32 %v954, %v1093
        %s1095 = sld [smem:[#allocation4 + $0x3]]
        %v1096 = vstv %s1095
        %v1097 = vmul.f32 %v1096, %v670
        %v1098 = vadd.f32 %v1097, 0.0
        %s1099 = sld [smem:[#allocation4 + $0x34]]
        %v1100 = vstv %s1099
        %v1101 = vmul.f32 %v1100, %v675
        %v1102 = vadd.f32 %v1101, 0.0
        %s1103 = sld [smem:[#allocation4 + $0xa]]
        %v1104 = vstv %s1103
        %v1105 = vmul.f32 %v1104, %v670
        %1107 = vrot.lane.b32.xlu0 %v1105, 112
        %v1108 = vpop.permute.xlu0 %1107
        %v1109 = vrot.slane %v1108, 1
        %v1110 = vsel %vm686, %v1108, %v1109
        %v1112 = vadd.f32 %v1098, %v1110
        %s1113 = sld [smem:[#allocation4 + $0x3b]]
        %v1114 = vstv %s1113
        %v1115 = vmul.f32 %v1114, %v675
        %1117 = vrot.lane.b32.xlu0 %v1115, 112
        %v1118 = vpop.permute.xlu0 %1117
        %v1119 = vrot.slane %v1118, 1
        %v1120 = vsel %vm686, %v1118, %v1119
        %v1122 = vadd.f32 %v1102, %v1120
        %s1123 = sld [smem:[#allocation4 + $0x11]]
        %v1124 = vstv %s1123
        %v1125 = vmul.f32 %v1124, %v670
        %1127 = vrot.lane.b32.xlu0 %v1125, 96
        %v1128 = vpop.permute.xlu0 %1127
        %v1129 = vrot.slane %v1128, 1
        %v1130 = vsel %vm707, %v1128, %v1129
        %v1132 = vadd.f32 %v1112, %v1130
        %s1133 = sld [smem:[#allocation4 + $0x42]]
        %v1134 = vstv %s1133
        %v1135 = vmul.f32 %v1134, %v675
        %1137 = vrot.lane.b32.xlu0 %v1135, 96
        %v1138 = vpop.permute.xlu0 %1137
        %v1139 = vrot.slane %v1138, 1
        %v1140 = vsel %vm707, %v1138, %v1139
        %v1142 = vadd.f32 %v1122, %v1140
        %s1143 = sld [smem:[#allocation4 + $0x18]]
        %v1144 = vstv %s1143
        %v1145 = vmul.f32 %v1144, %v670
        %1147 = vrot.lane.b32.xlu0 %v1145, 80
        %v1148 = vpop.permute.xlu0 %1147
        %v1149 = vrot.slane %v1148, 1
        %v1150 = vsel %vm728, %v1148, %v1149
        %v1152 = vadd.f32 %v1132, %v1150
        %s1153 = sld [smem:[#allocation4 + $0x49]]
        %v1154 = vstv %s1153
        %v1155 = vmul.f32 %v1154, %v675
        %1157 = vrot.lane.b32.xlu0 %v1155, 80
        %v1158 = vpop.permute.xlu0 %1157
        %v1159 = vrot.slane %v1158, 1
        %v1160 = vsel %vm728, %v1158, %v1159
        %v1162 = vadd.f32 %v1142, %v1160
        %s1163 = sld [smem:[#allocation4 + $0x1f]]
        %v1164 = vstv %s1163
        %v1165 = vmul.f32 %v1164, %v670
        %1167 = vrot.lane.b32.xlu0 %v1165, 64
        %v1168 = vpop.permute.xlu0 %1167
        %v1169 = vrot.slane %v1168, 1
        %v1170 = vsel %vm637, %v1168, %v1169
        %v1172 = vadd.f32 %v1152, %v1170
        %s1173 = sld [smem:[#allocation4 + $0x50]]
        %v1174 = vstv %s1173
        %v1175 = vmul.f32 %v1174, %v675
        %1177 = vrot.lane.b32.xlu0 %v1175, 64
        %v1178 = vpop.permute.xlu0 %1177
        %v1179 = vrot.slane %v1178, 1
        %v1180 = vsel %vm637, %v1178, %v1179
        %v1182 = vadd.f32 %v1162, %v1180
        %s1183 = sld [smem:[#allocation4 + $0x26]]
        %v1184 = vstv %s1183
        %v1185 = vmul.f32 %v1184, %v670
        %1187 = vrot.lane.b32.xlu0 %v1185, 48
        %v1188 = vpop.permute.xlu0 %1187
        %v1189 = vrot.slane %v1188, 1
        %v1190 = vsel %vm769, %v1188, %v1189
        %v1192 = vadd.f32 %v1172, %v1190
        %s1193 = sld [smem:[#allocation4 + $0x57]]
        %v1194 = vstv %s1193
        %v1195 = vmul.f32 %v1194, %v675
        %1197 = vrot.lane.b32.xlu0 %v1195, 48
        %v1198 = vpop.permute.xlu0 %1197
        %v1199 = vrot.slane %v1198, 1
        %v1200 = vsel %vm769, %v1198, %v1199
        %v1202 = vadd.f32 %v1182, %v1200
        %s1203 = sld [smem:[#allocation4 + $0x2d]]
        %v1204 = vstv %s1203
        %v1205 = vmul.f32 %v1204, %v670
        %1207 = vrot.lane.b32.xlu0 %v1205, 32
        %v1208 = vpop.permute.xlu0 %1207
        %v1209 = vrot.slane %v1208, 1
        %v1210 = vsel %vm790, %v1208, %v1209
        %v1212 = vadd.f32 %v1192, %v1210
        %s1213 = sld [smem:[#allocation4 + $0x5e]]
        %v1214 = vstv %s1213
        %v1215 = vmul.f32 %v1214, %v675
        %1217 = vrot.lane.b32.xlu0 %v1215, 32
        %v1218 = vpop.permute.xlu0 %1217
        %v1219 = vrot.slane %v1218, 1
        %v1220 = vsel %vm790, %v1218, %v1219
        %v1222 = vadd.f32 %v1202, %v1220
        %s1223 = scalar_lea.vmem %s3, 3
        %v1224 = vld [vmem:[%s1223] ss:$8 sm:$0x3]
        %v1225 = vadd.f32 %v1212, %v1222
        %1227 = vrot.lane.b32.xlu0 %v1225, 112
        %v1228 = vpop.permute.xlu0 %1227
        %v1229 = vrot.slane %v1228, 1
        %v1230 = vsel %vm686, %v1228, %v1229
        %v1232 = vmul.f32 %v1224, %v1230
        %v1233 = vadd.f32 %v1094, %v1232
        %s1234 = sld [smem:[#allocation4 + $0x4]]
        %v1235 = vstv %s1234
        %v1236 = vmul.f32 %v1235, %v670
        %v1237 = vadd.f32 %v1236, 0.0
        %s1238 = sld [smem:[#allocation4 + $0x35]]
        %v1239 = vstv %s1238
        %v1240 = vmul.f32 %v1239, %v675
        %v1241 = vadd.f32 %v1240, 0.0
        %s1242 = sld [smem:[#allocation4 + $0xb]]
        %v1243 = vstv %s1242
        %v1244 = vmul.f32 %v1243, %v670
        %1246 = vrot.lane.b32.xlu0 %v1244, 112
        %v1247 = vpop.permute.xlu0 %1246
        %v1248 = vrot.slane %v1247, 1
        %v1249 = vsel %vm686, %v1247, %v1248
        %v1251 = vadd.f32 %v1237, %v1249
        %s1252 = sld [smem:[#allocation4 + $0x3c]]
        %v1253 = vstv %s1252
        %v1254 = vmul.f32 %v1253, %v675
        %1256 = vrot.lane.b32.xlu0 %v1254, 112
        %v1257 = vpop.permute.xlu0 %1256
        %v1258 = vrot.slane %v1257, 1
        %v1259 = vsel %vm686, %v1257, %v1258
        %v1261 = vadd.f32 %v1241, %v1259
        %s1262 = sld [smem:[#allocation4 + $0x12]]
        %v1263 = vstv %s1262
        %v1264 = vmul.f32 %v1263, %v670
        %1266 = vrot.lane.b32.xlu0 %v1264, 96
        %v1267 = vpop.permute.xlu0 %1266
        %v1268 = vrot.slane %v1267, 1
        %v1269 = vsel %vm707, %v1267, %v1268
        %v1271 = vadd.f32 %v1251, %v1269
        %s1272 = sld [smem:[#allocation4 + $0x43]]
        %v1273 = vstv %s1272
        %v1274 = vmul.f32 %v1273, %v675
        %1276 = vrot.lane.b32.xlu0 %v1274, 96
        %v1277 = vpop.permute.xlu0 %1276
        %v1278 = vrot.slane %v1277, 1
        %v1279 = vsel %vm707, %v1277, %v1278
        %v1281 = vadd.f32 %v1261, %v1279
        %s1282 = sld [smem:[#allocation4 + $0x19]]
        %v1283 = vstv %s1282
        %v1284 = vmul.f32 %v1283, %v670
        %1286 = vrot.lane.b32.xlu0 %v1284, 80
        %v1287 = vpop.permute.xlu0 %1286
        %v1288 = vrot.slane %v1287, 1
        %v1289 = vsel %vm728, %v1287, %v1288
        %v1291 = vadd.f32 %v1271, %v1289
        %s1292 = sld [smem:[#allocation4 + $0x4a]]
        %v1293 = vstv %s1292
        %v1294 = vmul.f32 %v1293, %v675
        %1296 = vrot.lane.b32.xlu0 %v1294, 80
        %v1297 = vpop.permute.xlu0 %1296
        %v1298 = vrot.slane %v1297, 1
        %v1299 = vsel %vm728, %v1297, %v1298
        %v1301 = vadd.f32 %v1281, %v1299
        %s1302 = sld [smem:[#allocation4 + $0x20]]
        %v1303 = vstv %s1302
        %v1304 = vmul.f32 %v1303, %v670
        %1306 = vrot.lane.b32.xlu0 %v1304, 64
        %v1307 = vpop.permute.xlu0 %1306
        %v1308 = vrot.slane %v1307, 1
        %v1309 = vsel %vm637, %v1307, %v1308
        %v1311 = vadd.f32 %v1291, %v1309
        %s1312 = sld [smem:[#allocation4 + $0x51]]
        %v1313 = vstv %s1312
        %v1314 = vmul.f32 %v1313, %v675
        %1316 = vrot.lane.b32.xlu0 %v1314, 64
        %v1317 = vpop.permute.xlu0 %1316
        %v1318 = vrot.slane %v1317, 1
        %v1319 = vsel %vm637, %v1317, %v1318
        %v1321 = vadd.f32 %v1301, %v1319
        %s1322 = sld [smem:[#allocation4 + $0x27]]
        %v1323 = vstv %s1322
        %v1324 = vmul.f32 %v1323, %v670
        %1326 = vrot.lane.b32.xlu0 %v1324, 48
        %v1327 = vpop.permute.xlu0 %1326
        %v1328 = vrot.slane %v1327, 1
        %v1329 = vsel %vm769, %v1327, %v1328
        %v1331 = vadd.f32 %v1311, %v1329
        %s1332 = sld [smem:[#allocation4 + $0x58]]
        %v1333 = vstv %s1332
        %v1334 = vmul.f32 %v1333, %v675
        %1336 = vrot.lane.b32.xlu0 %v1334, 48
        %v1337 = vpop.permute.xlu0 %1336
        %v1338 = vrot.slane %v1337, 1
        %v1339 = vsel %vm769, %v1337, %v1338
        %v1341 = vadd.f32 %v1321, %v1339
        %s1342 = sld [smem:[#allocation4 + $0x2e]]
        %v1343 = vstv %s1342
        %v1344 = vmul.f32 %v1343, %v670
        %1346 = vrot.lane.b32.xlu0 %v1344, 32
        %v1347 = vpop.permute.xlu0 %1346
        %v1348 = vrot.slane %v1347, 1
        %v1349 = vsel %vm790, %v1347, %v1348
        %v1351 = vadd.f32 %v1331, %v1349
        %s1352 = sld [smem:[#allocation4 + $0x5f]]
        %v1353 = vstv %s1352
        %v1354 = vmul.f32 %v1353, %v675
        %1356 = vrot.lane.b32.xlu0 %v1354, 32
        %v1357 = vpop.permute.xlu0 %1356
        %v1358 = vrot.slane %v1357, 1
        %v1359 = vsel %vm790, %v1357, %v1358
        %v1361 = vadd.f32 %v1341, %v1359
        %s1362 = scalar_lea.vmem %s3, 4
        %v1363 = vld [vmem:[%s1362] ss:$8 sm:$0x3]
        %v1364 = vadd.f32 %v1351, %v1361
        %1366 = vrot.lane.b32.xlu0 %v1364, 111
        %v1367 = vpop.permute.xlu0 %1366
        %v1368 = vrot.slane %v1367, 1
        %vm1369 = vcmask 908288
        %v1370 = vsel %vm1369, %v1367, %v1368
        %v1372 = vmul.f32 %v1363, %v1370
        %v1373 = vadd.f32 %v1233, %v1372
        %s1374 = sld [smem:[#allocation4 + $0x5]]
        %v1375 = vstv %s1374
        %v1376 = vmul.f32 %v1375, %v670
        %v1377 = vadd.f32 %v1376, 0.0
        %s1378 = sld [smem:[#allocation4 + $0x36]]
        %v1379 = vstv %s1378
        %v1380 = vmul.f32 %v1379, %v675
        %v1381 = vadd.f32 %v1380, 0.0
        %s1382 = sld [smem:[#allocation4 + $0xc]]
        %v1383 = vstv %s1382
        %v1384 = vmul.f32 %v1383, %v670
        %1386 = vrot.lane.b32.xlu0 %v1384, 112
        %v1387 = vpop.permute.xlu0 %1386
        %v1388 = vrot.slane %v1387, 1
        %v1389 = vsel %vm686, %v1387, %v1388
        %v1391 = vadd.f32 %v1377, %v1389
        %s1392 = sld [smem:[#allocation4 + $0x3d]]
        %v1393 = vstv %s1392
        %v1394 = vmul.f32 %v1393, %v675
        %1396 = vrot.lane.b32.xlu0 %v1394, 112
        %v1397 = vpop.permute.xlu0 %1396
        %v1398 = vrot.slane %v1397, 1
        %v1399 = vsel %vm686, %v1397, %v1398
        %v1401 = vadd.f32 %v1381, %v1399
        %s1402 = sld [smem:[#allocation4 + $0x13]]
        %v1403 = vstv %s1402
        %v1404 = vmul.f32 %v1403, %v670
        %1406 = vrot.lane.b32.xlu0 %v1404, 96
        %v1407 = vpop.permute.xlu0 %1406
        %v1408 = vrot.slane %v1407, 1
        %v1409 = vsel %vm707, %v1407, %v1408
        %v1411 = vadd.f32 %v1391, %v1409
        %s1412 = sld [smem:[#allocation4 + $0x44]]
        %v1413 = vstv %s1412
        %v1414 = vmul.f32 %v1413, %v675
        %1416 = vrot.lane.b32.xlu0 %v1414, 96
        %v1417 = vpop.permute.xlu0 %1416
        %v1418 = vrot.slane %v1417, 1
        %v1419 = vsel %vm707, %v1417, %v1418
        %v1421 = vadd.f32 %v1401, %v1419
        %s1422 = sld [smem:[#allocation4 + $0x1a]]
        %v1423 = vstv %s1422
        %v1424 = vmul.f32 %v1423, %v670
        %1426 = vrot.lane.b32.xlu0 %v1424, 80
        %v1427 = vpop.permute.xlu0 %1426
        %v1428 = vrot.slane %v1427, 1
        %v1429 = vsel %vm728, %v1427, %v1428
        %v1431 = vadd.f32 %v1411, %v1429
        %s1432 = sld [smem:[#allocation4 + $0x4b]]
        %v1433 = vstv %s1432
        %v1434 = vmul.f32 %v1433, %v675
        %1436 = vrot.lane.b32.xlu0 %v1434, 80
        %v1437 = vpop.permute.xlu0 %1436
        %v1438 = vrot.slane %v1437, 1
        %v1439 = vsel %vm728, %v1437, %v1438
        %v1441 = vadd.f32 %v1421, %v1439
        %s1442 = sld [smem:[#allocation4 + $0x21]]
        %v1443 = vstv %s1442
        %v1444 = vmul.f32 %v1443, %v670
        %1446 = vrot.lane.b32.xlu0 %v1444, 64
        %v1447 = vpop.permute.xlu0 %1446
        %v1448 = vrot.slane %v1447, 1
        %v1449 = vsel %vm637, %v1447, %v1448
        %v1451 = vadd.f32 %v1431, %v1449
        %s1452 = sld [smem:[#allocation4 + $0x52]]
        %v1453 = vstv %s1452
        %v1454 = vmul.f32 %v1453, %v675
        %1456 = vrot.lane.b32.xlu0 %v1454, 64
        %v1457 = vpop.permute.xlu0 %1456
        %v1458 = vrot.slane %v1457, 1
        %v1459 = vsel %vm637, %v1457, %v1458
        %v1461 = vadd.f32 %v1441, %v1459
        %s1462 = sld [smem:[#allocation4 + $0x28]]
        %v1463 = vstv %s1462
        %v1464 = vmul.f32 %v1463, %v670
        %1466 = vrot.lane.b32.xlu0 %v1464, 48
        %v1467 = vpop.permute.xlu0 %1466
        %v1468 = vrot.slane %v1467, 1
        %v1469 = vsel %vm769, %v1467, %v1468
        %v1471 = vadd.f32 %v1451, %v1469
        %s1472 = sld [smem:[#allocation4 + $0x59]]
        %v1473 = vstv %s1472
        %v1474 = vmul.f32 %v1473, %v675
        %1476 = vrot.lane.b32.xlu0 %v1474, 48
        %v1477 = vpop.permute.xlu0 %1476
        %v1478 = vrot.slane %v1477, 1
        %v1479 = vsel %vm769, %v1477, %v1478
        %v1481 = vadd.f32 %v1461, %v1479
        %s1482 = sld [smem:[#allocation4 + $0x2f]]
        %v1483 = vstv %s1482
        %v1484 = vmul.f32 %v1483, %v670
        %1486 = vrot.lane.b32.xlu0 %v1484, 32
        %v1487 = vpop.permute.xlu0 %1486
        %v1488 = vrot.slane %v1487, 1
        %v1489 = vsel %vm790, %v1487, %v1488
        %v1491 = vadd.f32 %v1471, %v1489
        %s1492 = sld [smem:[#allocation4 + $0x60]]
        %v1493 = vstv %s1492
        %v1494 = vmul.f32 %v1493, %v675
        %1496 = vrot.lane.b32.xlu0 %v1494, 32
        %v1497 = vpop.permute.xlu0 %1496
        %v1498 = vrot.slane %v1497, 1
        %v1499 = vsel %vm790, %v1497, %v1498
        %v1501 = vadd.f32 %v1481, %v1499
        %s1502 = scalar_lea.vmem %s3, 5
        %v1503 = vld [vmem:[%s1502] ss:$8 sm:$0x3]
        %v1504 = vadd.f32 %v1491, %v1501
        %1506 = vrot.lane.b32.xlu0 %v1504, 110
        %v1507 = vpop.permute.xlu0 %1506
        %v1508 = vrot.slane %v1507, 1
        %vm1509 = vcmask 900096
        %v1510 = vsel %vm1509, %v1507, %v1508
        %v1512 = vmul.f32 %v1503, %v1510
        %v1513 = vadd.f32 %v1373, %v1512
        %s1514 = sld [smem:[#allocation4 + $0x6]]
        %v1515 = vstv %s1514
        %v1516 = vmul.f32 %v1515, %v670
        %v1517 = vadd.f32 %v1516, 0.0
        %s1518 = sld [smem:[#allocation4 + $0x37]]
        %v1519 = vstv %s1518
        %v1520 = vmul.f32 %v1519, %v675
        %v1521 = vadd.f32 %v1520, 0.0
        %s1522 = sld [smem:[#allocation4 + $0xd]]
        %v1523 = vstv %s1522
        %v1524 = vmul.f32 %v1523, %v670
        %1526 = vrot.lane.b32.xlu0 %v1524, 112
        %v1527 = vpop.permute.xlu0 %1526
        %v1528 = vrot.slane %v1527, 1
        %v1529 = vsel %vm686, %v1527, %v1528
        %v1531 = vadd.f32 %v1517, %v1529
        %s1532 = sld [smem:[#allocation4 + $0x3e]]
        %v1533 = vstv %s1532
        %v1534 = vmul.f32 %v1533, %v675
        %1536 = vrot.lane.b32.xlu0 %v1534, 112
        %v1537 = vpop.permute.xlu0 %1536
        %v1538 = vrot.slane %v1537, 1
        %v1539 = vsel %vm686, %v1537, %v1538
        %v1541 = vadd.f32 %v1521, %v1539
        %s1542 = sld [smem:[#allocation4 + $0x14]]
        %v1543 = vstv %s1542
        %v1544 = vmul.f32 %v1543, %v670
        %1546 = vrot.lane.b32.xlu0 %v1544, 96
        %v1547 = vpop.permute.xlu0 %1546
        %v1548 = vrot.slane %v1547, 1
        %v1549 = vsel %vm707, %v1547, %v1548
        %v1551 = vadd.f32 %v1531, %v1549
        %s1552 = sld [smem:[#allocation4 + $0x45]]
        %v1553 = vstv %s1552
        %v1554 = vmul.f32 %v1553, %v675
        %1556 = vrot.lane.b32.xlu0 %v1554, 96
        %v1557 = vpop.permute.xlu0 %1556
        %v1558 = vrot.slane %v1557, 1
        %v1559 = vsel %vm707, %v1557, %v1558
        %v1561 = vadd.f32 %v1541, %v1559
        %s1562 = sld [smem:[#allocation4 + $0x1b]]
        %v1563 = vstv %s1562
        %v1564 = vmul.f32 %v1563, %v670
        %1566 = vrot.lane.b32.xlu0 %v1564, 80
        %v1567 = vpop.permute.xlu0 %1566
        %v1568 = vrot.slane %v1567, 1
        %v1569 = vsel %vm728, %v1567, %v1568
        %v1571 = vadd.f32 %v1551, %v1569
        %s1572 = sld [smem:[#allocation4 + $0x4c]]
        %v1573 = vstv %s1572
        %v1574 = vmul.f32 %v1573, %v675
        %1576 = vrot.lane.b32.xlu0 %v1574, 80
        %v1577 = vpop.permute.xlu0 %1576
        %v1578 = vrot.slane %v1577, 1
        %v1579 = vsel %vm728, %v1577, %v1578
        %v1581 = vadd.f32 %v1561, %v1579
        %s1582 = sld [smem:[#allocation4 + $0x22]]
        %v1583 = vstv %s1582
        %v1584 = vmul.f32 %v1583, %v670
        %1586 = vrot.lane.b32.xlu0 %v1584, 64
        %v1587 = vpop.permute.xlu0 %1586
        %v1588 = vrot.slane %v1587, 1
        %v1589 = vsel %vm637, %v1587, %v1588
        %v1591 = vadd.f32 %v1571, %v1589
        %s1592 = sld [smem:[#allocation4 + $0x53]]
        %v1593 = vstv %s1592
        %v1594 = vmul.f32 %v1593, %v675
        %1596 = vrot.lane.b32.xlu0 %v1594, 64
        %v1597 = vpop.permute.xlu0 %1596
        %v1598 = vrot.slane %v1597, 1
        %v1599 = vsel %vm637, %v1597, %v1598
        %v1601 = vadd.f32 %v1581, %v1599
        %s1602 = sld [smem:[#allocation4 + $0x29]]
        %v1603 = vstv %s1602
        %v1604 = vmul.f32 %v1603, %v670
        %1606 = vrot.lane.b32.xlu0 %v1604, 48
        %v1607 = vpop.permute.xlu0 %1606
        %v1608 = vrot.slane %v1607, 1
        %v1609 = vsel %vm769, %v1607, %v1608
        %v1611 = vadd.f32 %v1591, %v1609
        %s1612 = sld [smem:[#allocation4 + $0x5a]]
        %v1613 = vstv %s1612
        %v1614 = vmul.f32 %v1613, %v675
        %1616 = vrot.lane.b32.xlu0 %v1614, 48
        %v1617 = vpop.permute.xlu0 %1616
        %v1618 = vrot.slane %v1617, 1
        %v1619 = vsel %vm769, %v1617, %v1618
        %v1621 = vadd.f32 %v1601, %v1619
        %s1622 = sld [smem:[#allocation4 + $0x30]]
        %v1623 = vstv %s1622
        %v1624 = vmul.f32 %v1623, %v670
        %1626 = vrot.lane.b32.xlu0 %v1624, 32
        %v1627 = vpop.permute.xlu0 %1626
        %v1628 = vrot.slane %v1627, 1
        %v1629 = vsel %vm790, %v1627, %v1628
        %v1631 = vadd.f32 %v1611, %v1629
        %s1632 = sld [smem:[#allocation4 + $0x61]]
        %v1633 = vstv %s1632
        %v1634 = vmul.f32 %v1633, %v675
        %1636 = vrot.lane.b32.xlu0 %v1634, 32
        %v1637 = vpop.permute.xlu0 %1636
        %v1638 = vrot.slane %v1637, 1
        %v1639 = vsel %vm790, %v1637, %v1638
        %v1641 = vadd.f32 %v1621, %v1639
        %s1642 = scalar_lea.vmem %s3, 6
        %v1643 = vld [vmem:[%s1642] ss:$8 sm:$0x3]
        %v1644 = vadd.f32 %v1631, %v1641
        %1646 = vrot.lane.b32.xlu0 %v1644, 109
        %v1647 = vpop.permute.xlu0 %1646
        %v1648 = vrot.slane %v1647, 1
        %vm1649 = vcmask 891904
        %v1650 = vsel %vm1649, %v1647, %v1648
        %v1652 = vmul.f32 %v1643, %v1650
        %v1653 = vadd.f32 %v1513, %v1652
        %s1654 = sld [smem:[#allocation3]]
        %v1655 = vstv %s1654
        %v1656 = vadd.f32 %v1653, %v1655
        %v1657 = vxor.u32 %v1656, 2147483648
        %v1658 = vmul.f32 %v1657, 1.442695
        %v1659 = vpow.pop %v1658
        %v1660 = vadd.f32 %v1659, 1.0
        %v1661 = vrcp.pop %v1660
        %v1662 = vmul.f32 1.0, %v1661
        %v1664 = vlaneseq
        %v1665 = vshrl.u32 %v1664, 7
        %v1666 = vsub.s32 0, %v1665
        %v1667 = vrot.slane %v1662, %v1666
        %v1668 = vlaneseq
        %v1669 = vshrl.u32 %v1668, 7
        %v1670 = vsub.s32 1, %v1669
        %v1671 = vrot.slane %v1662, %v1670
        %v1674 = vmul.f32 %v556, %v1667
        %v1675 = vmul.f32 %v556, %v1671
        %v1676 = vmul.f32 %v560, %v1667
        %v1677 = vmul.f32 %v560, %v1671
        %v1678 = vmul.f32 %v564, %v1667
        %v1679 = vmul.f32 %v564, %v1671
        %v1680 = vmul.f32 %v568, %v1667
        %v1681 = vmul.f32 %v568, %v1671
        %v1682 = vmul.f32 %v267, %v1674
        %v1683 = vmul.f32 %v268, %v1675
        %v1684 = vmul.f32 %v269, %v1676
        %v1685 = vmul.f32 %v270, %v1677
        %v1686 = vmul.f32 %v271, %v1678
        %v1687 = vmul.f32 %v272, %v1679
        %v1688 = vmul.f32 %v273, %v1680
        %v1689 = vmul.f32 %v274, %v1681
        %1690 = vst [vmem:[%s266] sm:$0xff] %v1682
        %1691 = vst [vmem:[%s266 + $0x8] sm:$0xff] %v1683
        %1692 = vst [vmem:[%s266 + $0x10] sm:$0xff] %v1684
        %1693 = vst [vmem:[%s266 + $0x18] sm:$0xff] %v1685
        %1694 = vst [vmem:[%s266 + $0x20] sm:$0xff] %v1686
        %1695 = vst [vmem:[%s266 + $0x28] sm:$0xff] %v1687
        %1696 = vst [vmem:[%s266 + $0x30] sm:$0xff] %v1688
        %1697 = vst [vmem:[%s266 + $0x38] sm:$0xff] %v1689
        %p1698 = scmp.lt.s32.totalorder %s19, 1
        %s1699 = scalar_select %p1698, %s19, 1
        %s1700 = smul.addr %s1699, 8
        %s1701 = smul.addr %s1700, 8
        %s1702 = scalar_lea.vmem %s6, %s1701
        // Predicated region
        $region49: #{cbam_pallas.1} parent=43 // pred_check
          %p1703 = pneg %p168
        $region50: #{cbam_pallas.1} parent=43 // pred_check_branch
          %1705 = sbr.rel (%p1703) target = $region52
        $region51: #{cbam_pallas.1} parent=43 // pred_region
          _
        $region52: #{cbam_pallas.1} parent=43 // pred_fallthru
          _
      $region44: #{cbam_pallas.1} parent=5 // pred_fallthru
        _
      %p1706 = scmp.le.s32.totalorder 2, %s14
      // Predicated region
      $region53: #{cbam_pallas.1} parent=5 // pred_check
        %p1707 = pneg %p1706
      $region54: #{cbam_pallas.1} parent=5 // pred_check_branch
        %1709 = sbr.rel (%p1707) target = $region56
      $region55: #{cbam_pallas.1} parent=5 // pred_region
        %s1710 = ssub.s32 %s14, 2
        // Predicated region
        $region57: #{cbam_pallas.1} parent=55 // pred_check
          %p1711 = pneg %p174
        $region58: #{cbam_pallas.1} parent=55 // pred_check_branch
          %1713 = sbr.rel (%p1711) target = $region60
        $region59: #{cbam_pallas.1} parent=55 // pred_region
          %p1714 = scmp.lt.s32.totalorder %s20, 1
          %s1715 = scalar_select %p1714, %s20, 1
          %s1716 = smul.addr %s1715, 8
          %s1717 = smul.addr %s1716, 8
          %s1718 = scalar_lea.vmem %s6, %s1717
        $region60: #{cbam_pallas.1} parent=55 // pred_fallthru
          _
      $region56: #{cbam_pallas.1} parent=5 // pred_fallthru
        _
    $region6: #{cbam_pallas.1} parent=1 // loop_footer
      %s18 = sadd.s32 1, %s14
    $region7: #{cbam_pallas.1} parent=1 // loop_footer_branch
      %13 = sbr.rel target = $region3
    $region8: #{cbam_pallas.1} parent=1 // loop_exit
      _
    %1719 = vsyncpa [#allocation5], 1
    %s1720 = scalar_lea.sflag [#allocation5], 1
    %1721 = vsyncpa %s1720, 1

</llo_original>
